<compile_context>
chip_gen: v7x
topology: tpu7x:2x2x1
jax: 0.10.0
libtpu: 0.0.40
codegen_flags: <defaults>
</compile_context>

<pallas_src>
import jax
import jax.numpy as jnp
from jax.experimental import pallas as pl
from jax.experimental.pallas import tpu as pltpu

LANE = 128
SUBLANE = 8


def _round_up(x, m):
    return ((x + m - 1) // m) * m


def unet_kernel(x_ref,
                w1_ref, b1_ref,
                w2_ref, b2_ref,
                wc1_ref, bc1_ref,
                wc2_ref, bc2_ref,
                wc3_ref, bc3_ref,
                w4_ref, b4_ref,
                wo_ref, bo_ref,
                out_ref):
    """Whole UNet forward for one batch tile; all 7 matmuls stay on the MXU."""
    x = x_ref[...]  # bf16 (tb, 128)

    def lin_tanh(h, w_ref, b_ref):
        # bf16 x bf16 -> f32 accumulate on the MXU, bias add + tanh in f32.
        acc = jnp.dot(h.astype(jnp.bfloat16), w_ref[...],
                      preferred_element_type=jnp.float32) + b_ref[...]
        return jnp.tanh(acc)

    in1 = lin_tanh(x, w1_ref, b1_ref)                  # layer1
    in2 = lin_tanh(in1, w2_ref, b2_ref)                # layer2
    c = lin_tanh(in2, wc1_ref, bc1_ref)                # center[0:2]
    c = lin_tanh(c, wc2_ref, bc2_ref)                  # center[2:4]
    center = lin_tanh(c, wc3_ref, bc3_ref)             # center[4:6]
    out1 = lin_tanh(center + in2, w4_ref, b4_ref)      # layer4 (skip from in2)
    # output: Linear only (no activation), skip from in1
    h = (out1 + in1).astype(jnp.bfloat16)
    out_ref[...] = (
        jnp.dot(h, wo_ref[...], preferred_element_type=jnp.float32) + bo_ref[...]
    ).astype(out_ref.dtype)


def _pad_params(params):
    """Zero-pad each (W, b) to lane multiples; W -> bf16, b -> f32 (1, N)."""
    padded = []
    for w, b in params:
        kin, kout = w.shape
        kp, np_ = _round_up(kin, LANE), _round_up(kout, LANE)
        wpad = jnp.zeros((kp, np_), jnp.bfloat16).at[:kin, :kout].set(
            w.astype(jnp.bfloat16))
        bpad = jnp.zeros((1, np_), jnp.float32).at[0, :kout].set(
            b.astype(jnp.float32))
        padded.append((wpad, bpad))
    return padded


def unet_forward(x, params, *, batch_tile=256):
    """params: list of (W, b) with W of shape (in, out), b of shape (out,)."""
    B, in_dim = x.shape
    out_dim = params[-1][0].shape[1]

    padded = _pad_params(params)
    in_p = padded[0][0].shape[0]
    out_p = padded[-1][0].shape[1]

    # Sublane-aligned batch tile; batch zero-padded up to a tile multiple so the
    # grid has >=1 full step (>=2 steps whenever the batch allows, for v7x megacore).
    tb = _round_up(min(batch_tile, _round_up(B, SUBLANE)), SUBLANE)
    B_pad = _round_up(B, tb)
    grid = (B_pad // tb,)

    x_pad = jnp.zeros((B_pad, in_p), jnp.bfloat16).at[:B, :in_dim].set(
        x.astype(jnp.bfloat16))

    flat_args = []
    in_specs = [pl.BlockSpec((tb, in_p), lambda i: (i, 0))]
    for w, b in padded:
        flat_args.extend([w, b])
        # Constant block index across the batch grid axis -> fetched once.
        in_specs.append(pl.BlockSpec(w.shape, lambda i: (0, 0)))
        in_specs.append(pl.BlockSpec(b.shape, lambda i: (0, 0)))

    flops = 2 * B_pad * sum(int(w.shape[0]) * int(w.shape[1]) for w, _ in padded)
    transcendentals = B_pad * sum(int(w.shape[1]) for w, _ in padded[:-1])
    bytes_accessed = (
        x_pad.size * 2                       # bf16 input
        + B_pad * out_p * 4                  # f32 output
        + sum(w.size * 2 + b.size * 4 for w, b in padded)
    )

    out = pl.pallas_call(
        unet_kernel,
        out_shape=jax.ShapeDtypeStruct((B_pad, out_p), jnp.float32),
        grid=grid,
        in_specs=in_specs,
        out_specs=pl.BlockSpec((tb, out_p), lambda i: (i, 0)),
        compiler_params=pltpu.CompilerParams(dimension_semantics=("parallel",)),
        cost_estimate=pl.CostEstimate(
            flops=int(flops),
            transcendentals=int(transcendentals),
            bytes_accessed=int(bytes_accessed)),
    )(x_pad, *flat_args)

    return out[:B, :out_dim]


def init_linear(key, fan_in, fan_out):
    """Deterministic PyTorch-style uniform(-1/sqrt(fan_in), 1/sqrt(fan_in)) init."""
    kw, kb = jax.random.split(key)
    bound = 1.0 / jnp.sqrt(jnp.float32(fan_in))
    w = jax.random.uniform(kw, (fan_in, fan_out), jnp.float32, -bound, bound)
    b = jax.random.uniform(kb, (fan_out,), jnp.float32, -bound, bound)
    return w, b


def unet_reference(x, params):
    """Plain-JAX reference mirroring the PyTorch forward (and the kernel's bf16
    weight/activation rounding, with f32 accumulation)."""
    def lin(h, w, b, act=True):
        hb = h.astype(jnp.bfloat16).astype(jnp.float32)
        wb = w.astype(jnp.bfloat16).astype(jnp.float32)
        y = hb @ wb + b
        return jnp.tanh(y) if act else y

    (w1, b1), (w2, b2), (wc1, bc1), (wc2, bc2), (wc3, bc3), (w4, b4), (wo, bo) = params
    in1 = lin(x, w1, b1)
    in2 = lin(in1, w2, b2)
    c = lin(in2, wc1, bc1)
    c = lin(c, wc2, bc2)
    center = lin(c, wc3, bc3)
    out1 = lin(center + in2, w4, b4)
    return lin(out1 + in1, wo, bo, act=False)


if __name__ == "__main__":
    # The forward pass requires unet_link_layers[3] == unet_link_layers[2]
    # (center + in2) and unet_link_layers[4] == unet_link_layers[1] (out1 + in1).
    unet_link_layers = [32, 64, 128, 128, 64, 16]
    center_layers = [96, 48]
    batch = 512          # 2 parallel grid steps at batch_tile=256
    batch_tile = 256

    key = jax.random.PRNGKey(0)
    keys = jax.random.split(key, 8)

    L = unet_link_layers
    C = center_layers
    params = [
        init_linear(keys[0], L[0], L[1]),   # layer1
        init_linear(keys[1], L[1], L[2]),   # layer2
        init_linear(keys[2], L[2], C[0]),   # center linear 1
        init_linear(keys[3], C[0], C[1]),   # center linear 2
        init_linear(keys[4], C[1], L[3]),   # center linear 3
        init_linear(keys[5], L[3], L[4]),   # layer4
        init_linear(keys[6], L[4], L[-1]),  # output
    ]

    x = jax.random.normal(keys[7], (batch, L[0]), jnp.float32)

    out = unet_forward(x, params, batch_tile=batch_tile)
    out = jax.block_until_ready(out)

    ref = unet_reference(x, params)
    assert out.shape == (batch, L[-1])
    assert jnp.allclose(out, ref, atol=2e-3, rtol=2e-3), "mismatch vs reference"

    print("KERNEL_OK")
</pallas_src>

<mosaic_0001>
module attributes {stable_mosaic.version = 11 : i64} {
  func.func @unet_kernel(%arg0: i32, %arg1: memref<256x128xbf16, #tpu.memory_space<vmem>>, %arg2: memref<128x128xbf16, #tpu.memory_space<vmem>>, %arg3: memref<1x128xf32, #tpu.memory_space<vmem>>, %arg4: memref<128x128xbf16, #tpu.memory_space<vmem>>, %arg5: memref<1x128xf32, #tpu.memory_space<vmem>>, %arg6: memref<128x128xbf16, #tpu.memory_space<vmem>>, %arg7: memref<1x128xf32, #tpu.memory_space<vmem>>, %arg8: memref<128x128xbf16, #tpu.memory_space<vmem>>, %arg9: memref<1x128xf32, #tpu.memory_space<vmem>>, %arg10: memref<128x128xbf16, #tpu.memory_space<vmem>>, %arg11: memref<1x128xf32, #tpu.memory_space<vmem>>, %arg12: memref<128x128xbf16, #tpu.memory_space<vmem>>, %arg13: memref<1x128xf32, #tpu.memory_space<vmem>>, %arg14: memref<128x128xbf16, #tpu.memory_space<vmem>>, %arg15: memref<1x128xf32, #tpu.memory_space<vmem>>, %arg16: memref<256x128xf32, #tpu.memory_space<vmem>>) attributes {dimension_semantics = [#tpu.dimension_semantics<parallel>], iteration_bounds = array<i64: 2>, scalar_prefetch = 0 : i64, scratch_operands = 0 : i64, tpu.core_type = #tpu.core_type<tc>, window_params = [{transform_indices = @transform_0, window_bounds = array<i64: 256, 128>}, {pipeline_mode = #tpu.pipeline_mode<synchronous>, transform_indices = @transform_1, window_bounds = array<i64: 128, 128>}, {pipeline_mode = #tpu.pipeline_mode<synchronous>, transform_indices = @transform_2, window_bounds = array<i64: 1, 128>}, {pipeline_mode = #tpu.pipeline_mode<synchronous>, transform_indices = @transform_3, window_bounds = array<i64: 128, 128>}, {pipeline_mode = #tpu.pipeline_mode<synchronous>, transform_indices = @transform_4, window_bounds = array<i64: 1, 128>}, {pipeline_mode = #tpu.pipeline_mode<synchronous>, transform_indices = @transform_5, window_bounds = array<i64: 128, 128>}, {pipeline_mode = #tpu.pipeline_mode<synchronous>, transform_indices = @transform_6, window_bounds = array<i64: 1, 128>}, {pipeline_mode = #tpu.pipeline_mode<synchronous>, transform_indices = @transform_7, window_bounds = array<i64: 128, 128>}, {pipeline_mode = #tpu.pipeline_mode<synchronous>, transform_indices = @transform_8, window_bounds = array<i64: 1, 128>}, {pipeline_mode = #tpu.pipeline_mode<synchronous>, transform_indices = @transform_9, window_bounds = array<i64: 128, 128>}, {pipeline_mode = #tpu.pipeline_mode<synchronous>, transform_indices = @transform_10, window_bounds = array<i64: 1, 128>}, {pipeline_mode = #tpu.pipeline_mode<synchronous>, transform_indices = @transform_11, window_bounds = array<i64: 128, 128>}, {pipeline_mode = #tpu.pipeline_mode<synchronous>, transform_indices = @transform_12, window_bounds = array<i64: 1, 128>}, {pipeline_mode = #tpu.pipeline_mode<synchronous>, transform_indices = @transform_13, window_bounds = array<i64: 128, 128>}, {pipeline_mode = #tpu.pipeline_mode<synchronous>, transform_indices = @transform_14, window_bounds = array<i64: 1, 128>}, {transform_indices = @transform_15, window_bounds = array<i64: 256, 128>}]} {
    %c0 = arith.constant 0 : index
    %c0_0 = arith.constant 0 : index
    %0 = vector.load %arg1[%c0, %c0_0] : memref<256x128xbf16, #tpu.memory_space<vmem>>, vector<256x128xbf16>
    %c0_1 = arith.constant 0 : index
    %c0_2 = arith.constant 0 : index
    %1 = vector.load %arg2[%c0_1, %c0_2] : memref<128x128xbf16, #tpu.memory_space<vmem>>, vector<128x128xbf16>
    %cst = arith.constant dense<0.000000e+00> : vector<256x128xf32>
    %2 = tpu.matmul %0, %1, %cst {dimension_numbers = #tpu.dot_dimension_numbers<[1], [0], [0], [1], [0, 0, 1, 1], [], []>} : vector<256x128xbf16>, vector<128x128xbf16>, vector<256x128xf32> -> vector<256x128xf32>
    %c0_3 = arith.constant 0 : index
    %c0_4 = arith.constant 0 : index
    %3 = vector.load %arg3[%c0_3, %c0_4] : memref<1x128xf32, #tpu.memory_space<vmem>>, vector<1x128xf32>
    %4 = vector.broadcast %3 : vector<1x128xf32> to vector<256x128xf32>
    %5 = arith.addf %2, %4 : vector<256x128xf32>
    %6 = math.tanh %5 : vector<256x128xf32>
    %7 = arith.truncf %6 : vector<256x128xf32> to vector<256x128xbf16>
    %c0_5 = arith.constant 0 : index
    %c0_6 = arith.constant 0 : index
    %8 = vector.load %arg4[%c0_5, %c0_6] : memref<128x128xbf16, #tpu.memory_space<vmem>>, vector<128x128xbf16>
    %cst_7 = arith.constant dense<0.000000e+00> : vector<256x128xf32>
    %9 = tpu.matmul %7, %8, %cst_7 {dimension_numbers = #tpu.dot_dimension_numbers<[1], [0], [0], [1], [0, 0, 1, 1], [], []>} : vector<256x128xbf16>, vector<128x128xbf16>, vector<256x128xf32> -> vector<256x128xf32>
    %c0_8 = arith.constant 0 : index
    %c0_9 = arith.constant 0 : index
    %10 = vector.load %arg5[%c0_8, %c0_9] : memref<1x128xf32, #tpu.memory_space<vmem>>, vector<1x128xf32>
    %11 = vector.broadcast %10 : vector<1x128xf32> to vector<256x128xf32>
    %12 = arith.addf %9, %11 : vector<256x128xf32>
    %13 = math.tanh %12 : vector<256x128xf32>
    %14 = arith.truncf %13 : vector<256x128xf32> to vector<256x128xbf16>
    %c0_10 = arith.constant 0 : index
    %c0_11 = arith.constant 0 : index
    %15 = vector.load %arg6[%c0_10, %c0_11] : memref<128x128xbf16, #tpu.memory_space<vmem>>, vector<128x128xbf16>
    %cst_12 = arith.constant dense<0.000000e+00> : vector<256x128xf32>
    %16 = tpu.matmul %14, %15, %cst_12 {dimension_numbers = #tpu.dot_dimension_numbers<[1], [0], [0], [1], [0, 0, 1, 1], [], []>} : vector<256x128xbf16>, vector<128x128xbf16>, vector<256x128xf32> -> vector<256x128xf32>
    %c0_13 = arith.constant 0 : index
    %c0_14 = arith.constant 0 : index
    %17 = vector.load %arg7[%c0_13, %c0_14] : memref<1x128xf32, #tpu.memory_space<vmem>>, vector<1x128xf32>
    %18 = vector.broadcast %17 : vector<1x128xf32> to vector<256x128xf32>
    %19 = arith.addf %16, %18 : vector<256x128xf32>
    %20 = math.tanh %19 : vector<256x128xf32>
    %21 = arith.truncf %20 : vector<256x128xf32> to vector<256x128xbf16>
    %c0_15 = arith.constant 0 : index
    %c0_16 = arith.constant 0 : index
    %22 = vector.load %arg8[%c0_15, %c0_16] : memref<128x128xbf16, #tpu.memory_space<vmem>>, vector<128x128xbf16>
    %cst_17 = arith.constant dense<0.000000e+00> : vector<256x128xf32>
    %23 = tpu.matmul %21, %22, %cst_17 {dimension_numbers = #tpu.dot_dimension_numbers<[1], [0], [0], [1], [0, 0, 1, 1], [], []>} : vector<256x128xbf16>, vector<128x128xbf16>, vector<256x128xf32> -> vector<256x128xf32>
    %c0_18 = arith.constant 0 : index
    %c0_19 = arith.constant 0 : index
    %24 = vector.load %arg9[%c0_18, %c0_19] : memref<1x128xf32, #tpu.memory_space<vmem>>, vector<1x128xf32>
    %25 = vector.broadcast %24 : vector<1x128xf32> to vector<256x128xf32>
    %26 = arith.addf %23, %25 : vector<256x128xf32>
    %27 = math.tanh %26 : vector<256x128xf32>
    %28 = arith.truncf %27 : vector<256x128xf32> to vector<256x128xbf16>
    %c0_20 = arith.constant 0 : index
    %c0_21 = arith.constant 0 : index
    %29 = vector.load %arg10[%c0_20, %c0_21] : memref<128x128xbf16, #tpu.memory_space<vmem>>, vector<128x128xbf16>
    %cst_22 = arith.constant dense<0.000000e+00> : vector<256x128xf32>
    %30 = tpu.matmul %28, %29, %cst_22 {dimension_numbers = #tpu.dot_dimension_numbers<[1], [0], [0], [1], [0, 0, 1, 1], [], []>} : vector<256x128xbf16>, vector<128x128xbf16>, vector<256x128xf32> -> vector<256x128xf32>
    %c0_23 = arith.constant 0 : index
    %c0_24 = arith.constant 0 : index
    %31 = vector.load %arg11[%c0_23, %c0_24] : memref<1x128xf32, #tpu.memory_space<vmem>>, vector<1x128xf32>
    %32 = vector.broadcast %31 : vector<1x128xf32> to vector<256x128xf32>
    %33 = arith.addf %30, %32 : vector<256x128xf32>
    %34 = math.tanh %33 : vector<256x128xf32>
    %35 = arith.addf %34, %13 : vector<256x128xf32>
    %36 = arith.truncf %35 : vector<256x128xf32> to vector<256x128xbf16>
    %c0_25 = arith.constant 0 : index
    %c0_26 = arith.constant 0 : index
    %37 = vector.load %arg12[%c0_25, %c0_26] : memref<128x128xbf16, #tpu.memory_space<vmem>>, vector<128x128xbf16>
    %cst_27 = arith.constant dense<0.000000e+00> : vector<256x128xf32>
    %38 = tpu.matmul %36, %37, %cst_27 {dimension_numbers = #tpu.dot_dimension_numbers<[1], [0], [0], [1], [0, 0, 1, 1], [], []>} : vector<256x128xbf16>, vector<128x128xbf16>, vector<256x128xf32> -> vector<256x128xf32>
    %c0_28 = arith.constant 0 : index
    %c0_29 = arith.constant 0 : index
    %39 = vector.load %arg13[%c0_28, %c0_29] : memref<1x128xf32, #tpu.memory_space<vmem>>, vector<1x128xf32>
    %40 = vector.broadcast %39 : vector<1x128xf32> to vector<256x128xf32>
    %41 = arith.addf %38, %40 : vector<256x128xf32>
    %42 = math.tanh %41 : vector<256x128xf32>
    %43 = arith.addf %42, %6 : vector<256x128xf32>
    %44 = arith.truncf %43 : vector<256x128xf32> to vector<256x128xbf16>
    %c0_30 = arith.constant 0 : index
    %c0_31 = arith.constant 0 : index
    %45 = vector.load %arg14[%c0_30, %c0_31] : memref<128x128xbf16, #tpu.memory_space<vmem>>, vector<128x128xbf16>
    %cst_32 = arith.constant dense<0.000000e+00> : vector<256x128xf32>
    %46 = tpu.matmul %44, %45, %cst_32 {dimension_numbers = #tpu.dot_dimension_numbers<[1], [0], [0], [1], [0, 0, 1, 1], [], []>} : vector<256x128xbf16>, vector<128x128xbf16>, vector<256x128xf32> -> vector<256x128xf32>
    %c0_33 = arith.constant 0 : index
    %c0_34 = arith.constant 0 : index
    %47 = vector.load %arg15[%c0_33, %c0_34] : memref<1x128xf32, #tpu.memory_space<vmem>>, vector<1x128xf32>
    %48 = vector.broadcast %47 : vector<1x128xf32> to vector<256x128xf32>
    %49 = arith.addf %46, %48 : vector<256x128xf32>
    %c0_35 = arith.constant 0 : index
    %c0_36 = arith.constant 0 : index
    %50 = vector.load %arg16[%c0_35, %c0_36] : memref<256x128xf32, #tpu.memory_space<vmem>>, vector<256x128xf32>
    tpu.vector_store %arg16[%c0_35, %c0_36], %49 {strides = array<i32>} : memref<256x128xf32, #tpu.memory_space<vmem>>, vector<256x128xf32>,
    return
  }
  func.func @transform_0(%arg0: i32) -> (i32, i32) {
    %c0_i32 = arith.constant 0 : i32
    %c0_i32_0 = arith.constant 0 : i32
    return %arg0, %c0_i32 : i32, i32
  }
  func.func @transform_1(%arg0: i32) -> (i32, i32) {
    %c0_i32 = arith.constant 0 : i32
    %c0_i32_0 = arith.constant 0 : i32
    %c0_i32_1 = arith.constant 0 : i32
    return %c0_i32, %c0_i32_0 : i32, i32
  }
  func.func @transform_2(%arg0: i32) -> (i32, i32) {
    %c0_i32 = arith.constant 0 : i32
    %c0_i32_0 = arith.constant 0 : i32
    %c0_i32_1 = arith.constant 0 : i32
    return %c0_i32, %c0_i32_0 : i32, i32
  }
  func.func @transform_3(%arg0: i32) -> (i32, i32) {
    %c0_i32 = arith.constant 0 : i32
    %c0_i32_0 = arith.constant 0 : i32
    %c0_i32_1 = arith.constant 0 : i32
    return %c0_i32, %c0_i32_0 : i32, i32
  }
  func.func @transform_4(%arg0: i32) -> (i32, i32) {
    %c0_i32 = arith.constant 0 : i32
    %c0_i32_0 = arith.constant 0 : i32
    %c0_i32_1 = arith.constant 0 : i32
    return %c0_i32, %c0_i32_0 : i32, i32
  }
  func.func @transform_5(%arg0: i32) -> (i32, i32) {
    %c0_i32 = arith.constant 0 : i32
    %c0_i32_0 = arith.constant 0 : i32
    %c0_i32_1 = arith.constant 0 : i32
    return %c0_i32, %c0_i32_0 : i32, i32
  }
  func.func @transform_6(%arg0: i32) -> (i32, i32) {
    %c0_i32 = arith.constant 0 : i32
    %c0_i32_0 = arith.constant 0 : i32
    %c0_i32_1 = arith.constant 0 : i32
    return %c0_i32, %c0_i32_0 : i32, i32
  }
  func.func @transform_7(%arg0: i32) -> (i32, i32) {
    %c0_i32 = arith.constant 0 : i32
    %c0_i32_0 = arith.constant 0 : i32
    %c0_i32_1 = arith.constant 0 : i32
    return %c0_i32, %c0_i32_0 : i32, i32
  }
  func.func @transform_8(%arg0: i32) -> (i32, i32) {
    %c0_i32 = arith.constant 0 : i32
    %c0_i32_0 = arith.constant 0 : i32
    %c0_i32_1 = arith.constant 0 : i32
    return %c0_i32, %c0_i32_0 : i32, i32
  }
  func.func @transform_9(%arg0: i32) -> (i32, i32) {
    %c0_i32 = arith.constant 0 : i32
    %c0_i32_0 = arith.constant 0 : i32
    %c0_i32_1 = arith.constant 0 : i32
    return %c0_i32, %c0_i32_0 : i32, i32
  }
  func.func @transform_10(%arg0: i32) -> (i32, i32) {
    %c0_i32 = arith.constant 0 : i32
    %c0_i32_0 = arith.constant 0 : i32
    %c0_i32_1 = arith.constant 0 : i32
    return %c0_i32, %c0_i32_0 : i32, i32
  }
  func.func @transform_11(%arg0: i32) -> (i32, i32) {
    %c0_i32 = arith.constant 0 : i32
    %c0_i32_0 = arith.constant 0 : i32
    %c0_i32_1 = arith.constant 0 : i32
    return %c0_i32, %c0_i32_0 : i32, i32
  }
  func.func @transform_12(%arg0: i32) -> (i32, i32) {
    %c0_i32 = arith.constant 0 : i32
    %c0_i32_0 = arith.constant 0 : i32
    %c0_i32_1 = arith.constant 0 : i32
    return %c0_i32, %c0_i32_0 : i32, i32
  }
  func.func @transform_13(%arg0: i32) -> (i32, i32) {
    %c0_i32 = arith.constant 0 : i32
    %c0_i32_0 = arith.constant 0 : i32
    %c0_i32_1 = arith.constant 0 : i32
    return %c0_i32, %c0_i32_0 : i32, i32
  }
  func.func @transform_14(%arg0: i32) -> (i32, i32) {
    %c0_i32 = arith.constant 0 : i32
    %c0_i32_0 = arith.constant 0 : i32
    %c0_i32_1 = arith.constant 0 : i32
    return %c0_i32, %c0_i32_0 : i32, i32
  }
  func.func @transform_15(%arg0: i32) -> (i32, i32) {
    %c0_i32 = arith.constant 0 : i32
    %c0_i32_0 = arith.constant 0 : i32
    return %arg0, %c0_i32 : i32, i32
  }
}

</mosaic_0001>

<llo_original>
// kernel: tpu_custom_call.1
$region0: #{tpu_custom_call.1}
  #allocation0 [shape = 'u32[]', space=smem, size = 0x4, offset = 0x4, fixed_abs, tag = 'smem constant byte address 0x4 - core index']
  #allocation1 [shape = 'u32[144,128]{1,0:T(1,128)}', space=vmem, size = 0x12000, scoped, tag = 'internal scratch']
  %s0 = inlined_call_operand.hbm [shape: bf16[512,128], index: 0, kind: input, shape index: {}]
  %s1 = inlined_call_operand.hbm [shape: bf16[128,128], index: 1, kind: input, shape index: {}]
  %s2 = inlined_call_operand.vmem [shape: f32[1,128], index: 2, kind: input, shape index: {}]
  %s3 = inlined_call_operand.hbm [shape: bf16[128,128], index: 3, kind: input, shape index: {}]
  %s4 = inlined_call_operand.vmem [shape: f32[1,128], index: 4, kind: input, shape index: {}]
  %s5 = inlined_call_operand.hbm [shape: bf16[128,128], index: 5, kind: input, shape index: {}]
  %s6 = inlined_call_operand.vmem [shape: f32[1,128], index: 6, kind: input, shape index: {}]
  %s7 = inlined_call_operand.hbm [shape: bf16[128,128], index: 7, kind: input, shape index: {}]
  %s8 = inlined_call_operand.vmem [shape: f32[1,128], index: 8, kind: input, shape index: {}]
  %s9 = inlined_call_operand.hbm [shape: bf16[128,128], index: 9, kind: input, shape index: {}]
  %s10 = inlined_call_operand.vmem [shape: f32[1,128], index: 10, kind: input, shape index: {}]
  %s11 = inlined_call_operand.hbm [shape: bf16[128,128], index: 11, kind: input, shape index: {}]
  %s12 = inlined_call_operand.vmem [shape: f32[1,128], index: 12, kind: input, shape index: {}]
  %s13 = inlined_call_operand.hbm [shape: bf16[128,128], index: 13, kind: input, shape index: {}]
  %s14 = inlined_call_operand.vmem [shape: f32[1,128], index: 14, kind: input, shape index: {}]
  %s15 = inlined_call_operand.hbm [shape: f32[512,128], index: 15, kind: output, shape index: {}]
  %s16 = sld [smem:[#allocation0]]
  $region125: #{tpu_custom_call.1} parent=0
    _
  %s18 = ssub.s32 1, %s16
  %s19 = scalar_select 0, %s18, %s16
  $region1: #{tpu_custom_call.1} parent=0
    #allocation2 [shape = 'u8[131072]{0}', space=vmem, size = 0x20000, scoped, tag = 'input window, operand 0']
    #allocation3 [shape = 's32[2]{0}', space=sflag, size = 0x8, scoped, tag = 'scoped memory for tpu_custom_call.1']
    #allocation4 [shape = 's32[2]{0}', space=sflag, size = 0x8, scoped, tag = 'scoped memory for tpu_custom_call.1']
    #allocation5 [shape = 'u8[32768]{0}', space=vmem, size = 0x8000, scoped, tag = 'input window, operand 1, single buffered']
    #allocation6 [shape = 's32[1]{0}', space=sflag, size = 0x4, scoped, tag = 'scoped memory for tpu_custom_call.1']
    #allocation7 [shape = 'u8[32768]{0}', space=vmem, size = 0x8000, scoped, tag = 'input window, operand 3, single buffered']
    #allocation8 [shape = 'u8[32768]{0}', space=vmem, size = 0x8000, scoped, tag = 'input window, operand 5, single buffered']
    #allocation9 [shape = 's32[1]{0}', space=sflag, size = 0x4, scoped, tag = 'scoped memory for tpu_custom_call.1']
    #allocation10 [shape = 'u8[32768]{0}', space=vmem, size = 0x8000, scoped, tag = 'input window, operand 7, single buffered']
    #allocation11 [shape = 'u8[32768]{0}', space=vmem, size = 0x8000, scoped, tag = 'input window, operand 9, single buffered']
    #allocation12 [shape = 's32[1]{0}', space=sflag, size = 0x4, scoped, tag = 'scoped memory for tpu_custom_call.1']
    #allocation13 [shape = 'u8[32768]{0}', space=vmem, size = 0x8000, scoped, tag = 'input window, operand 11, single buffered']
    #allocation14 [shape = 'u8[32768]{0}', space=vmem, size = 0x8000, scoped, tag = 'input window, operand 13, single buffered']
    #allocation15 [shape = 's32[1]{0}', space=sflag, size = 0x4, scoped, tag = 'scoped memory for tpu_custom_call.1']
    #allocation16 [shape = 'u8[262144]{0}', space=vmem, size = 0x40000, scoped, tag = 'output window, operand 0']
    %20 = vsyncpa [#allocation3], 0
    %s21 = scalar_lea.sflag [#allocation3], 1
    %22 = vsyncpa %s21, 0
    %23 = vsyncpa [#allocation6], 0
    %24 = vsyncpa [#allocation9], 0
    %25 = vsyncpa [#allocation12], 0
    %26 = vsyncpa [#allocation15], 0
    %27 = vsyncpa [#allocation4], 0
    %s28 = scalar_lea.sflag [#allocation4], 1
    %29 = vsyncpa %s28, 0
    loop: start=0, step=1, limit=4
    $region2: #{tpu_custom_call.1} parent=1 // loop_pre_header
      _
    $region3: #{tpu_custom_call.1} parent=1 // loop_header
      %s31 = sphi 0, %s35
      %p32 = scmp.ge.s32.totalorder %s31, 4
      %s41 = sphi 0, %s43
      %s44 = sphi 0, %s41
      %s45 = sphi 0, %s44
      %s61 = sphi 0, %s45
      %s65 = sphi 0, %s65
      %s67 = sphi 0, %s65
      %s68 = sphi 0, %s67
      %s82 = sphi 0, %s68
      %s86 = sphi 0, %s86
      %s88 = sphi 0, %s86
      %s89 = sphi 0, %s88
      %s103 = sphi 0, %s89
      %s107 = sphi 0, %s107
      %s109 = sphi 0, %s107
      %s110 = sphi 0, %s109
      %s124 = sphi 0, %s110
      %s128 = sphi 0, %s128
      %s130 = sphi 0, %s128
      %s131 = sphi 0, %s130
      %s145 = sphi 0, %s131
      %s149 = sphi 0, %s149
      %s151 = sphi 0, %s149
      %s152 = sphi 0, %s151
      %s166 = sphi 0, %s152
      %s170 = sphi 0, %s170
      %s172 = sphi 0, %s170
      %s173 = sphi 0, %s172
      %s187 = sphi 0, %s173
      %s191 = sphi 0, %s191
      %s193 = sphi 0, %s191
      %s194 = sphi 0, %s193
      %s208 = sphi 0, %s194
      %s212 = sphi 0, %s212
      %s214 = sphi 0, %s212
      %s215 = sphi 0, %s214
      %s229 = sphi 0, %s215
      %s233 = sphi 0, %s233
      %s235 = sphi 0, %s233
      %s236 = sphi 0, %s235
      %s250 = sphi 0, %s236
      %s254 = sphi 0, %s254
      %s256 = sphi 0, %s254
      %s257 = sphi 0, %s256
      %s271 = sphi 0, %s257
      %s275 = sphi 0, %s275
      %s277 = sphi 0, %s275
      %s278 = sphi 0, %s277
      %s292 = sphi 0, %s278
      %s296 = sphi 0, %s296
      %s298 = sphi 0, %s296
      %s299 = sphi 0, %s298
      %s313 = sphi 0, %s299
      %s317 = sphi 0, %s317
      %s319 = sphi 0, %s317
      %s320 = sphi 0, %s319
      %s334 = sphi 0, %s320
      %s338 = sphi 0, %s338
      %s340 = sphi 0, %s338
      %s341 = sphi 0, %s340
      %s355 = sphi 0, %s341
      %s361 = sphi 0, %s363
      %s364 = sphi 0, %s361
      %s365 = sphi 0, %s364
      %s381 = sphi 0, %s365
    $region4: #{tpu_custom_call.1} parent=1 // loop_header_branch
      %34 = sbr.rel (%p32) target = $region8
    $region5: #{tpu_custom_call.1} parent=1 // loop_body
      %s36 = ssub.s32 %s31, 1
      %s37 = ssub.s32 %s31, 2
      %s38 = sadd.s32 %s31, 1
      %s39 = ssub.s32 %s31, %s38
      %p40 = scmp.eq.s32.totalorder %s39, 0
      %s42 = sadd.s32 %s41, 1
      %s43 = scalar_select %p40, %s41, %s42
      %p46 = pneg %p40
      %p47 = scmp.eq.s32.totalorder %s31, 1
      %p48 = por %p46, %p47
      %p49 = scmp.ne.s32.totalorder %s41, %s44
      %p50 = scmp.eq.s32.totalorder %s31, 0
      %p51 = por %p49, %p50
      %p52 = scmp.ne.s32.totalorder %s41, %s44
      %p53 = scmp.eq.s32.totalorder %s36, 1
      %p54 = por %p52, %p53
      %p55 = scmp.ne.s32.totalorder %s44, %s45
      %p56 = scmp.eq.s32.totalorder %s36, 0
      %p57 = por %p55, %p56
      %p58 = scmp.ne.s32.totalorder %s44, %s45
      %p59 = scmp.eq.s32.totalorder %s37, 1
      %p60 = por %p58, %p59
      %p62 = scmp.ne.s32.totalorder %s45, %s61
      %p63 = scmp.eq.s32.totalorder %s37, 0
      %p64 = por %p62, %p63
      %s66 = sadd.s32 %s65, 1
      %p69 = scmp.eq.s32.totalorder %s31, 1
      %p70 = scmp.ne.s32.totalorder %s65, %s67
      %p71 = scmp.eq.s32.totalorder %s31, 0
      %p72 = por %p70, %p71
      %p73 = scmp.ne.s32.totalorder %s65, %s67
      %p74 = scmp.eq.s32.totalorder %s36, 1
      %p75 = por %p73, %p74
      %p76 = scmp.ne.s32.totalorder %s67, %s68
      %p77 = scmp.eq.s32.totalorder %s36, 0
      %p78 = por %p76, %p77
      %p79 = scmp.ne.s32.totalorder %s67, %s68
      %p80 = scmp.eq.s32.totalorder %s37, 1
      %p81 = por %p79, %p80
      %p83 = scmp.ne.s32.totalorder %s68, %s82
      %p84 = scmp.eq.s32.totalorder %s37, 0
      %p85 = por %p83, %p84
      %s87 = sadd.s32 %s86, 1
      %p90 = scmp.eq.s32.totalorder %s31, 1
      %p91 = scmp.ne.s32.totalorder %s86, %s88
      %p92 = scmp.eq.s32.totalorder %s31, 0
      %p93 = por %p91, %p92
      %p94 = scmp.ne.s32.totalorder %s86, %s88
      %p95 = scmp.eq.s32.totalorder %s36, 1
      %p96 = por %p94, %p95
      %p97 = scmp.ne.s32.totalorder %s88, %s89
      %p98 = scmp.eq.s32.totalorder %s36, 0
      %p99 = por %p97, %p98
      %p100 = scmp.ne.s32.totalorder %s88, %s89
      %p101 = scmp.eq.s32.totalorder %s37, 1
      %p102 = por %p100, %p101
      %p104 = scmp.ne.s32.totalorder %s89, %s103
      %p105 = scmp.eq.s32.totalorder %s37, 0
      %p106 = por %p104, %p105
      %s108 = sadd.s32 %s107, 1
      %p111 = scmp.eq.s32.totalorder %s31, 1
      %p112 = scmp.ne.s32.totalorder %s107, %s109
      %p113 = scmp.eq.s32.totalorder %s31, 0
      %p114 = por %p112, %p113
      %p115 = scmp.ne.s32.totalorder %s107, %s109
      %p116 = scmp.eq.s32.totalorder %s36, 1
      %p117 = por %p115, %p116
      %p118 = scmp.ne.s32.totalorder %s109, %s110
      %p119 = scmp.eq.s32.totalorder %s36, 0
      %p120 = por %p118, %p119
      %p121 = scmp.ne.s32.totalorder %s109, %s110
      %p122 = scmp.eq.s32.totalorder %s37, 1
      %p123 = por %p121, %p122
      %p125 = scmp.ne.s32.totalorder %s110, %s124
      %p126 = scmp.eq.s32.totalorder %s37, 0
      %p127 = por %p125, %p126
      %s129 = sadd.s32 %s128, 1
      %p132 = scmp.eq.s32.totalorder %s31, 1
      %p133 = scmp.ne.s32.totalorder %s128, %s130
      %p134 = scmp.eq.s32.totalorder %s31, 0
      %p135 = por %p133, %p134
      %p136 = scmp.ne.s32.totalorder %s128, %s130
      %p137 = scmp.eq.s32.totalorder %s36, 1
      %p138 = por %p136, %p137
      %p139 = scmp.ne.s32.totalorder %s130, %s131
      %p140 = scmp.eq.s32.totalorder %s36, 0
      %p141 = por %p139, %p140
      %p142 = scmp.ne.s32.totalorder %s130, %s131
      %p143 = scmp.eq.s32.totalorder %s37, 1
      %p144 = por %p142, %p143
      %p146 = scmp.ne.s32.totalorder %s131, %s145
      %p147 = scmp.eq.s32.totalorder %s37, 0
      %p148 = por %p146, %p147
      %s150 = sadd.s32 %s149, 1
      %p153 = scmp.eq.s32.totalorder %s31, 1
      %p154 = scmp.ne.s32.totalorder %s149, %s151
      %p155 = scmp.eq.s32.totalorder %s31, 0
      %p156 = por %p154, %p155
      %p157 = scmp.ne.s32.totalorder %s149, %s151
      %p158 = scmp.eq.s32.totalorder %s36, 1
      %p159 = por %p157, %p158
      %p160 = scmp.ne.s32.totalorder %s151, %s152
      %p161 = scmp.eq.s32.totalorder %s36, 0
      %p162 = por %p160, %p161
      %p163 = scmp.ne.s32.totalorder %s151, %s152
      %p164 = scmp.eq.s32.totalorder %s37, 1
      %p165 = por %p163, %p164
      %p167 = scmp.ne.s32.totalorder %s152, %s166
      %p168 = scmp.eq.s32.totalorder %s37, 0
      %p169 = por %p167, %p168
      %s171 = sadd.s32 %s170, 1
      %p174 = scmp.eq.s32.totalorder %s31, 1
      %p175 = scmp.ne.s32.totalorder %s170, %s172
      %p176 = scmp.eq.s32.totalorder %s31, 0
      %p177 = por %p175, %p176
      %p178 = scmp.ne.s32.totalorder %s170, %s172
      %p179 = scmp.eq.s32.totalorder %s36, 1
      %p180 = por %p178, %p179
      %p181 = scmp.ne.s32.totalorder %s172, %s173
      %p182 = scmp.eq.s32.totalorder %s36, 0
      %p183 = por %p181, %p182
      %p184 = scmp.ne.s32.totalorder %s172, %s173
      %p185 = scmp.eq.s32.totalorder %s37, 1
      %p186 = por %p184, %p185
      %p188 = scmp.ne.s32.totalorder %s173, %s187
      %p189 = scmp.eq.s32.totalorder %s37, 0
      %p190 = por %p188, %p189
      %s192 = sadd.s32 %s191, 1
      %p195 = scmp.eq.s32.totalorder %s31, 1
      %p196 = scmp.ne.s32.totalorder %s191, %s193
      %p197 = scmp.eq.s32.totalorder %s31, 0
      %p198 = por %p196, %p197
      %p199 = scmp.ne.s32.totalorder %s191, %s193
      %p200 = scmp.eq.s32.totalorder %s36, 1
      %p201 = por %p199, %p200
      %p202 = scmp.ne.s32.totalorder %s193, %s194
      %p203 = scmp.eq.s32.totalorder %s36, 0
      %p204 = por %p202, %p203
      %p205 = scmp.ne.s32.totalorder %s193, %s194
      %p206 = scmp.eq.s32.totalorder %s37, 1
      %p207 = por %p205, %p206
      %p209 = scmp.ne.s32.totalorder %s194, %s208
      %p210 = scmp.eq.s32.totalorder %s37, 0
      %p211 = por %p209, %p210
      %s213 = sadd.s32 %s212, 1
      %p216 = scmp.eq.s32.totalorder %s31, 1
      %p217 = scmp.ne.s32.totalorder %s212, %s214
      %p218 = scmp.eq.s32.totalorder %s31, 0
      %p219 = por %p217, %p218
      %p220 = scmp.ne.s32.totalorder %s212, %s214
      %p221 = scmp.eq.s32.totalorder %s36, 1
      %p222 = por %p220, %p221
      %p223 = scmp.ne.s32.totalorder %s214, %s215
      %p224 = scmp.eq.s32.totalorder %s36, 0
      %p225 = por %p223, %p224
      %p226 = scmp.ne.s32.totalorder %s214, %s215
      %p227 = scmp.eq.s32.totalorder %s37, 1
      %p228 = por %p226, %p227
      %p230 = scmp.ne.s32.totalorder %s215, %s229
      %p231 = scmp.eq.s32.totalorder %s37, 0
      %p232 = por %p230, %p231
      %s234 = sadd.s32 %s233, 1
      %p237 = scmp.eq.s32.totalorder %s31, 1
      %p238 = scmp.ne.s32.totalorder %s233, %s235
      %p239 = scmp.eq.s32.totalorder %s31, 0
      %p240 = por %p238, %p239
      %p241 = scmp.ne.s32.totalorder %s233, %s235
      %p242 = scmp.eq.s32.totalorder %s36, 1
      %p243 = por %p241, %p242
      %p244 = scmp.ne.s32.totalorder %s235, %s236
      %p245 = scmp.eq.s32.totalorder %s36, 0
      %p246 = por %p244, %p245
      %p247 = scmp.ne.s32.totalorder %s235, %s236
      %p248 = scmp.eq.s32.totalorder %s37, 1
      %p249 = por %p247, %p248
      %p251 = scmp.ne.s32.totalorder %s236, %s250
      %p252 = scmp.eq.s32.totalorder %s37, 0
      %p253 = por %p251, %p252
      %s255 = sadd.s32 %s254, 1
      %p258 = scmp.eq.s32.totalorder %s31, 1
      %p259 = scmp.ne.s32.totalorder %s254, %s256
      %p260 = scmp.eq.s32.totalorder %s31, 0
      %p261 = por %p259, %p260
      %p262 = scmp.ne.s32.totalorder %s254, %s256
      %p263 = scmp.eq.s32.totalorder %s36, 1
      %p264 = por %p262, %p263
      %p265 = scmp.ne.s32.totalorder %s256, %s257
      %p266 = scmp.eq.s32.totalorder %s36, 0
      %p267 = por %p265, %p266
      %p268 = scmp.ne.s32.totalorder %s256, %s257
      %p269 = scmp.eq.s32.totalorder %s37, 1
      %p270 = por %p268, %p269
      %p272 = scmp.ne.s32.totalorder %s257, %s271
      %p273 = scmp.eq.s32.totalorder %s37, 0
      %p274 = por %p272, %p273
      %s276 = sadd.s32 %s275, 1
      %p279 = scmp.eq.s32.totalorder %s31, 1
      %p280 = scmp.ne.s32.totalorder %s275, %s277
      %p281 = scmp.eq.s32.totalorder %s31, 0
      %p282 = por %p280, %p281
      %p283 = scmp.ne.s32.totalorder %s275, %s277
      %p284 = scmp.eq.s32.totalorder %s36, 1
      %p285 = por %p283, %p284
      %p286 = scmp.ne.s32.totalorder %s277, %s278
      %p287 = scmp.eq.s32.totalorder %s36, 0
      %p288 = por %p286, %p287
      %p289 = scmp.ne.s32.totalorder %s277, %s278
      %p290 = scmp.eq.s32.totalorder %s37, 1
      %p291 = por %p289, %p290
      %p293 = scmp.ne.s32.totalorder %s278, %s292
      %p294 = scmp.eq.s32.totalorder %s37, 0
      %p295 = por %p293, %p294
      %s297 = sadd.s32 %s296, 1
      %p300 = scmp.eq.s32.totalorder %s31, 1
      %p301 = scmp.ne.s32.totalorder %s296, %s298
      %p302 = scmp.eq.s32.totalorder %s31, 0
      %p303 = por %p301, %p302
      %p304 = scmp.ne.s32.totalorder %s296, %s298
      %p305 = scmp.eq.s32.totalorder %s36, 1
      %p306 = por %p304, %p305
      %p307 = scmp.ne.s32.totalorder %s298, %s299
      %p308 = scmp.eq.s32.totalorder %s36, 0
      %p309 = por %p307, %p308
      %p310 = scmp.ne.s32.totalorder %s298, %s299
      %p311 = scmp.eq.s32.totalorder %s37, 1
      %p312 = por %p310, %p311
      %p314 = scmp.ne.s32.totalorder %s299, %s313
      %p315 = scmp.eq.s32.totalorder %s37, 0
      %p316 = por %p314, %p315
      %s318 = sadd.s32 %s317, 1
      %p321 = scmp.eq.s32.totalorder %s31, 1
      %p322 = scmp.ne.s32.totalorder %s317, %s319
      %p323 = scmp.eq.s32.totalorder %s31, 0
      %p324 = por %p322, %p323
      %p325 = scmp.ne.s32.totalorder %s317, %s319
      %p326 = scmp.eq.s32.totalorder %s36, 1
      %p327 = por %p325, %p326
      %p328 = scmp.ne.s32.totalorder %s319, %s320
      %p329 = scmp.eq.s32.totalorder %s36, 0
      %p330 = por %p328, %p329
      %p331 = scmp.ne.s32.totalorder %s319, %s320
      %p332 = scmp.eq.s32.totalorder %s37, 1
      %p333 = por %p331, %p332
      %p335 = scmp.ne.s32.totalorder %s320, %s334
      %p336 = scmp.eq.s32.totalorder %s37, 0
      %p337 = por %p335, %p336
      %s339 = sadd.s32 %s338, 1
      %p342 = scmp.eq.s32.totalorder %s31, 1
      %p343 = scmp.ne.s32.totalorder %s338, %s340
      %p344 = scmp.eq.s32.totalorder %s31, 0
      %p345 = por %p343, %p344
      %p346 = scmp.ne.s32.totalorder %s338, %s340
      %p347 = scmp.eq.s32.totalorder %s36, 1
      %p348 = por %p346, %p347
      %p349 = scmp.ne.s32.totalorder %s340, %s341
      %p350 = scmp.eq.s32.totalorder %s36, 0
      %p351 = por %p349, %p350
      %p352 = scmp.ne.s32.totalorder %s340, %s341
      %p353 = scmp.eq.s32.totalorder %s37, 1
      %p354 = por %p352, %p353
      %p356 = scmp.ne.s32.totalorder %s341, %s355
      %p357 = scmp.eq.s32.totalorder %s37, 0
      %p358 = por %p356, %p357
      %s359 = ssub.s32 %s31, %s38
      %p360 = scmp.eq.s32.totalorder %s359, 0
      %s362 = sadd.s32 %s361, 1
      %s363 = scalar_select %p360, %s361, %s362
      %p366 = pneg %p360
      %p367 = scmp.eq.s32.totalorder %s31, 1
      %p368 = por %p366, %p367
      %p369 = scmp.ne.s32.totalorder %s361, %s364
      %p370 = scmp.eq.s32.totalorder %s31, 0
      %p371 = por %p369, %p370
      %p372 = scmp.ne.s32.totalorder %s361, %s364
      %p373 = scmp.eq.s32.totalorder %s36, 1
      %p374 = por %p372, %p373
      %p375 = scmp.ne.s32.totalorder %s364, %s365
      %p376 = scmp.eq.s32.totalorder %s36, 0
      %p377 = por %p375, %p376
      %p378 = scmp.ne.s32.totalorder %s364, %s365
      %p379 = scmp.eq.s32.totalorder %s37, 1
      %p380 = por %p378, %p379
      %p382 = scmp.ne.s32.totalorder %s365, %s381
      %p383 = scmp.eq.s32.totalorder %s37, 0
      %p384 = por %p382, %p383
      %p385 = scmp.le.s32.totalorder 1, %s31
      %p386 = scmp.lt.s32.totalorder %s31, 3
      %p387 = pnand %p385, %p386
      %p388 = pneg %p387
      // Predicated region
      $region9: #{tpu_custom_call.1} parent=5 // pred_check
        _
      $region10: #{tpu_custom_call.1} parent=5 // pred_check_branch
        %390 = sbr.rel (%p387) target = $region12
      $region11: #{tpu_custom_call.1} parent=5 // pred_region
        %s391 = ssub.s32 %s31, 1
        // Predicated region
        $region13: #{tpu_custom_call.1} parent=11 // pred_check
          %p392 = pneg %p78
        $region14: #{tpu_custom_call.1} parent=11 // pred_check_branch
          %394 = sbr.rel (%p392) target = $region16
        $region15: #{tpu_custom_call.1} parent=11 // pred_region
          %s396 = ssub.s32 1024, 1024
          %397 = vsyncadd [#allocation6], %s396
          %s398 = sshll.u32 [#allocation5], 4
          %s399 = int_to_ptr.vmem [resolvable:$true] %s398
          %404 = dma.hbm_to_vmem [thread:$0]  %s1, 1024, %s399, [#allocation6], 64, 64, 4
        $region16: #{tpu_custom_call.1} parent=11 // pred_fallthru
          _
        // Predicated region
        $region17: #{tpu_custom_call.1} parent=11 // pred_check
          %p405 = pneg %p99
        $region18: #{tpu_custom_call.1} parent=11 // pred_check_branch
          %407 = sbr.rel (%p405) target = $region20
        $region19: #{tpu_custom_call.1} parent=11 // pred_region
          _
        $region20: #{tpu_custom_call.1} parent=11 // pred_fallthru
          _
        // Predicated region
        $region21: #{tpu_custom_call.1} parent=11 // pred_check
          %p408 = pneg %p120
        $region22: #{tpu_custom_call.1} parent=11 // pred_check_branch
          %410 = sbr.rel (%p408) target = $region24
        $region23: #{tpu_custom_call.1} parent=11 // pred_region
          %s412 = ssub.s32 1024, 1024
          %413 = vsyncadd [#allocation6], %s412
          %s414 = sshll.u32 [#allocation7], 4
          %s415 = int_to_ptr.vmem [resolvable:$true] %s414
          %420 = dma.hbm_to_vmem [thread:$0]  %s3, 1024, %s415, [#allocation6], 64, 64, 4
        $region24: #{tpu_custom_call.1} parent=11 // pred_fallthru
          _
        // Predicated region
        $region25: #{tpu_custom_call.1} parent=11 // pred_check
          %p421 = pneg %p141
        $region26: #{tpu_custom_call.1} parent=11 // pred_check_branch
          %423 = sbr.rel (%p421) target = $region28
        $region27: #{tpu_custom_call.1} parent=11 // pred_region
          _
        $region28: #{tpu_custom_call.1} parent=11 // pred_fallthru
          _
        // Predicated region
        $region29: #{tpu_custom_call.1} parent=11 // pred_check
          %p424 = pneg %p162
        $region30: #{tpu_custom_call.1} parent=11 // pred_check_branch
          %426 = sbr.rel (%p424) target = $region32
        $region31: #{tpu_custom_call.1} parent=11 // pred_region
          %s428 = ssub.s32 1024, 1024
          %429 = vsyncadd [#allocation9], %s428
          %s430 = sshll.u32 [#allocation8], 4
          %s431 = int_to_ptr.vmem [resolvable:$true] %s430
          %436 = dma.hbm_to_vmem [thread:$0]  %s5, 1024, %s431, [#allocation9], 64, 64, 4
        $region32: #{tpu_custom_call.1} parent=11 // pred_fallthru
          _
        // Predicated region
        $region33: #{tpu_custom_call.1} parent=11 // pred_check
          %p437 = pneg %p183
        $region34: #{tpu_custom_call.1} parent=11 // pred_check_branch
          %439 = sbr.rel (%p437) target = $region36
        $region35: #{tpu_custom_call.1} parent=11 // pred_region
          _
        $region36: #{tpu_custom_call.1} parent=11 // pred_fallthru
          _
        // Predicated region
        $region37: #{tpu_custom_call.1} parent=11 // pred_check
          %p440 = pneg %p204
        $region38: #{tpu_custom_call.1} parent=11 // pred_check_branch
          %442 = sbr.rel (%p440) target = $region40
        $region39: #{tpu_custom_call.1} parent=11 // pred_region
          %s444 = ssub.s32 1024, 1024
          %445 = vsyncadd [#allocation9], %s444
          %s446 = sshll.u32 [#allocation10], 4
          %s447 = int_to_ptr.vmem [resolvable:$true] %s446
          %452 = dma.hbm_to_vmem [thread:$0]  %s7, 1024, %s447, [#allocation9], 64, 64, 4
        $region40: #{tpu_custom_call.1} parent=11 // pred_fallthru
          _
        // Predicated region
        $region41: #{tpu_custom_call.1} parent=11 // pred_check
          %p453 = pneg %p225
        $region42: #{tpu_custom_call.1} parent=11 // pred_check_branch
          %455 = sbr.rel (%p453) target = $region44
        $region43: #{tpu_custom_call.1} parent=11 // pred_region
          _
        $region44: #{tpu_custom_call.1} parent=11 // pred_fallthru
          _
        // Predicated region
        $region45: #{tpu_custom_call.1} parent=11 // pred_check
          %p456 = pneg %p246
        $region46: #{tpu_custom_call.1} parent=11 // pred_check_branch
          %458 = sbr.rel (%p456) target = $region48
        $region47: #{tpu_custom_call.1} parent=11 // pred_region
          %s460 = ssub.s32 1024, 1024
          %461 = vsyncadd [#allocation12], %s460
          %s462 = sshll.u32 [#allocation11], 4
          %s463 = int_to_ptr.vmem [resolvable:$true] %s462
          %468 = dma.hbm_to_vmem [thread:$0]  %s9, 1024, %s463, [#allocation12], 64, 64, 4
        $region48: #{tpu_custom_call.1} parent=11 // pred_fallthru
          _
        // Predicated region
        $region49: #{tpu_custom_call.1} parent=11 // pred_check
          %p469 = pneg %p267
        $region50: #{tpu_custom_call.1} parent=11 // pred_check_branch
          %471 = sbr.rel (%p469) target = $region52
        $region51: #{tpu_custom_call.1} parent=11 // pred_region
          _
        $region52: #{tpu_custom_call.1} parent=11 // pred_fallthru
          _
        // Predicated region
        $region53: #{tpu_custom_call.1} parent=11 // pred_check
          %p472 = pneg %p288
        $region54: #{tpu_custom_call.1} parent=11 // pred_check_branch
          %474 = sbr.rel (%p472) target = $region56
        $region55: #{tpu_custom_call.1} parent=11 // pred_region
          %s476 = ssub.s32 1024, 1024
          %477 = vsyncadd [#allocation12], %s476
          %s478 = sshll.u32 [#allocation13], 4
          %s479 = int_to_ptr.vmem [resolvable:$true] %s478
          %484 = dma.hbm_to_vmem [thread:$0]  %s11, 1024, %s479, [#allocation12], 64, 64, 4
        $region56: #{tpu_custom_call.1} parent=11 // pred_fallthru
          _
        // Predicated region
        $region57: #{tpu_custom_call.1} parent=11 // pred_check
          %p485 = pneg %p309
        $region58: #{tpu_custom_call.1} parent=11 // pred_check_branch
          %487 = sbr.rel (%p485) target = $region60
        $region59: #{tpu_custom_call.1} parent=11 // pred_region
          _
        $region60: #{tpu_custom_call.1} parent=11 // pred_fallthru
          _
        // Predicated region
        $region61: #{tpu_custom_call.1} parent=11 // pred_check
          %p488 = pneg %p330
        $region62: #{tpu_custom_call.1} parent=11 // pred_check_branch
          %490 = sbr.rel (%p488) target = $region64
        $region63: #{tpu_custom_call.1} parent=11 // pred_region
          %s492 = ssub.s32 1024, 1024
          %493 = vsyncadd [#allocation15], %s492
          %s494 = sshll.u32 [#allocation14], 4
          %s495 = int_to_ptr.vmem [resolvable:$true] %s494
          %500 = dma.hbm_to_vmem [thread:$0]  %s13, 1024, %s495, [#allocation15], 64, 64, 4
        $region64: #{tpu_custom_call.1} parent=11 // pred_fallthru
          _
        // Predicated region
        $region65: #{tpu_custom_call.1} parent=11 // pred_check
          %p501 = pneg %p351
        $region66: #{tpu_custom_call.1} parent=11 // pred_check_branch
          %503 = sbr.rel (%p501) target = $region68
        $region67: #{tpu_custom_call.1} parent=11 // pred_region
          _
        $region68: #{tpu_custom_call.1} parent=11 // pred_fallthru
          _
      $region12: #{tpu_custom_call.1} parent=5 // pred_fallthru
        _
      %p504 = scmp.lt.s32.totalorder %s31, 2
      // Predicated region
      $region69: #{tpu_custom_call.1} parent=5 // pred_check
        %p505 = pneg %p504
      $region70: #{tpu_custom_call.1} parent=5 // pred_check_branch
        %507 = sbr.rel (%p505) target = $region72
      $region71: #{tpu_custom_call.1} parent=5 // pred_region
        // Predicated region
        $region73: #{tpu_custom_call.1} parent=71 // pred_check
          %p508 = pneg %p51
        $region74: #{tpu_custom_call.1} parent=71 // pred_check_branch
          %510 = sbr.rel (%p508) target = $region76
        $region75: #{tpu_custom_call.1} parent=71 // pred_region
          %s511 = sand.u32 %s41, 1
          %s512 = scalar_lea.sflag [#allocation3], %s511
          %s513 = sand.u32 %s41, 1
          %s514 = smul.addr %s513, 128
          %s515 = scalar_lea.vmem [#allocation2], %s514
          %s516 = smul.u32 32, %s31
          %s518 = ssub.s32 2048, 2048
          %519 = vsyncadd %s512, %s518
          %s520 = smul.addr %s516, 64
          %s521 = scalar_lea.hbm %s0, %s520
          %s522 = sshll.u32 %s515, 4
          %s523 = int_to_ptr.vmem [resolvable:$true] %s522
          %528 = dma.hbm_to_vmem [thread:$0]  %s521, 2048, %s523, %s512, 64, 64, 4
        $region76: #{tpu_custom_call.1} parent=71 // pred_fallthru
          _
      $region72: #{tpu_custom_call.1} parent=5 // pred_fallthru
        _
      %p529 = scmp.le.s32.totalorder 1, %s31
      %p530 = scmp.lt.s32.totalorder %s31, 3
      %p531 = pnand %p529, %p530
      %p532 = pneg %p531
      // Predicated region
      $region77: #{tpu_custom_call.1} parent=5 // pred_check
        _
      $region78: #{tpu_custom_call.1} parent=5 // pred_check_branch
        %534 = sbr.rel (%p531) target = $region80
      $region79: #{tpu_custom_call.1} parent=5 // pred_region
        %s535 = ssub.s32 %s31, 1
        %s536 = sand.u32 %s44, 1
        %s537 = scalar_lea.sflag [#allocation3], %s536
        %s538 = sand.u32 %s44, 1
        %s539 = smul.addr %s538, 128
        %s540 = scalar_lea.vmem [#allocation2], %s539
        // Predicated region
        $region81: #{tpu_custom_call.1} parent=79 // pred_check
          %p541 = pneg %p57
        $region82: #{tpu_custom_call.1} parent=79 // pred_check_branch
          %543 = sbr.rel (%p541) target = $region84
        $region83: #{tpu_custom_call.1} parent=79 // pred_region
          %544 = dma.done %s537, 2048
        $region84: #{tpu_custom_call.1} parent=79 // pred_fallthru
          _
        // Predicated region
        $region85: #{tpu_custom_call.1} parent=79 // pred_check
          %p545 = pneg %p78
        $region86: #{tpu_custom_call.1} parent=79 // pred_check_branch
          %547 = sbr.rel (%p545) target = $region88
        $region87: #{tpu_custom_call.1} parent=79 // pred_region
          %548 = dma.done [#allocation6], 1024
        $region88: #{tpu_custom_call.1} parent=79 // pred_fallthru
          _
        // Predicated region
        $region89: #{tpu_custom_call.1} parent=79 // pred_check
          %p549 = pneg %p120
        $region90: #{tpu_custom_call.1} parent=79 // pred_check_branch
          %551 = sbr.rel (%p549) target = $region92
        $region91: #{tpu_custom_call.1} parent=79 // pred_region
          %552 = dma.done [#allocation6], 1024
        $region92: #{tpu_custom_call.1} parent=79 // pred_fallthru
          _
        // Predicated region
        $region93: #{tpu_custom_call.1} parent=79 // pred_check
          %p553 = pneg %p162
        $region94: #{tpu_custom_call.1} parent=79 // pred_check_branch
          %555 = sbr.rel (%p553) target = $region96
        $region95: #{tpu_custom_call.1} parent=79 // pred_region
          %556 = dma.done [#allocation9], 1024
        $region96: #{tpu_custom_call.1} parent=79 // pred_fallthru
          _
        // Predicated region
        $region97: #{tpu_custom_call.1} parent=79 // pred_check
          %p557 = pneg %p204
        $region98: #{tpu_custom_call.1} parent=79 // pred_check_branch
          %559 = sbr.rel (%p557) target = $region100
        $region99: #{tpu_custom_call.1} parent=79 // pred_region
          %560 = dma.done [#allocation9], 1024
        $region100: #{tpu_custom_call.1} parent=79 // pred_fallthru
          _
        // Predicated region
        $region101: #{tpu_custom_call.1} parent=79 // pred_check
          %p561 = pneg %p246
        $region102: #{tpu_custom_call.1} parent=79 // pred_check_branch
          %563 = sbr.rel (%p561) target = $region104
        $region103: #{tpu_custom_call.1} parent=79 // pred_region
          %564 = dma.done [#allocation12], 1024
        $region104: #{tpu_custom_call.1} parent=79 // pred_fallthru
          _
        // Predicated region
        $region105: #{tpu_custom_call.1} parent=79 // pred_check
          %p565 = pneg %p288
        $region106: #{tpu_custom_call.1} parent=79 // pred_check_branch
          %567 = sbr.rel (%p565) target = $region108
        $region107: #{tpu_custom_call.1} parent=79 // pred_region
          %568 = dma.done [#allocation12], 1024
        $region108: #{tpu_custom_call.1} parent=79 // pred_fallthru
          _
        // Predicated region
        $region109: #{tpu_custom_call.1} parent=79 // pred_check
          %p569 = pneg %p330
        $region110: #{tpu_custom_call.1} parent=79 // pred_check_branch
          %571 = sbr.rel (%p569) target = $region112
        $region111: #{tpu_custom_call.1} parent=79 // pred_region
          %572 = dma.done [#allocation15], 1024
        $region112: #{tpu_custom_call.1} parent=79 // pred_fallthru
          _
        %s573 = sand.u32 %s44, 1
        %s574 = scalar_lea.sflag [#allocation3], %s573
        %s575 = sand.u32 %s44, 1
        %s576 = smul.addr %s575, 128
        %s577 = scalar_lea.vmem [#allocation2], %s576
        %p578 = pneg %p57
        %p579 = pneg %p54
        %p580 = pneg %p78
        %p581 = pneg %p75
        %p582 = pneg %p99
        %p583 = pneg %p96
        %p584 = pneg %p120
        %p585 = pneg %p117
        %p586 = pneg %p141
        %p587 = pneg %p138
        %p588 = pneg %p162
        %p589 = pneg %p159
        %p590 = pneg %p183
        %p591 = pneg %p180
        %p592 = pneg %p204
        %p593 = pneg %p201
        %p594 = pneg %p225
        %p595 = pneg %p222
        %p596 = pneg %p246
        %p597 = pneg %p243
        %p598 = pneg %p267
        %p599 = pneg %p264
        %p600 = pneg %p288
        %p601 = pneg %p285
        %p602 = pneg %p309
        %p603 = pneg %p306
        %p604 = pneg %p330
        %p605 = pneg %p327
        %p606 = pneg %p351
        %p607 = pneg %p348
        %p608 = pneg %p377
        %p609 = pneg %p374
        %s610 = sand.u32 %s364, 1
        %s611 = scalar_lea.sflag [#allocation4], %s610
        %s612 = sand.u32 %s364, 1
        %s613 = smul.addr %s612, 256
        %s614 = scalar_lea.vmem [#allocation16], %s613
        %s615 = smul.u32 32, %s36
        %s616 = smul.u32 32, %s36
        %v618 = vld [vmem:[%s540] sm:$0xf]
        %v619 = vld [vmem:[%s540 + $0x4] sm:$0xf]
        %v620 = vld [vmem:[%s540 + $0x8] sm:$0xf]
        %v621 = vld [vmem:[%s540 + $0xc] sm:$0xf]
        %v622 = vld [vmem:[%s540 + $0x10] sm:$0xf]
        %v623 = vld [vmem:[%s540 + $0x14] sm:$0xf]
        %v624 = vld [vmem:[%s540 + $0x18] sm:$0xf]
        %v625 = vld [vmem:[%s540 + $0x1c] sm:$0xf]
        %v626 = vld [vmem:[%s540 + $0x20] sm:$0xf]
        %v627 = vld [vmem:[%s540 + $0x24] sm:$0xf]
        %v628 = vld [vmem:[%s540 + $0x28] sm:$0xf]
        %v629 = vld [vmem:[%s540 + $0x2c] sm:$0xf]
        %v630 = vld [vmem:[%s540 + $0x30] sm:$0xf]
        %v631 = vld [vmem:[%s540 + $0x34] sm:$0xf]
        %v632 = vld [vmem:[%s540 + $0x38] sm:$0xf]
        %v633 = vld [vmem:[%s540 + $0x3c] sm:$0xf]
        %v634 = vld [vmem:[%s540 + $0x40] sm:$0xf]
        %v635 = vld [vmem:[%s540 + $0x44] sm:$0xf]
        %v636 = vld [vmem:[%s540 + $0x48] sm:$0xf]
        %v637 = vld [vmem:[%s540 + $0x4c] sm:$0xf]
        %v638 = vld [vmem:[%s540 + $0x50] sm:$0xf]
        %v639 = vld [vmem:[%s540 + $0x54] sm:$0xf]
        %v640 = vld [vmem:[%s540 + $0x58] sm:$0xf]
        %v641 = vld [vmem:[%s540 + $0x5c] sm:$0xf]
        %v642 = vld [vmem:[%s540 + $0x60] sm:$0xf]
        %v643 = vld [vmem:[%s540 + $0x64] sm:$0xf]
        %v644 = vld [vmem:[%s540 + $0x68] sm:$0xf]
        %v645 = vld [vmem:[%s540 + $0x6c] sm:$0xf]
        %v646 = vld [vmem:[%s540 + $0x70] sm:$0xf]
        %v647 = vld [vmem:[%s540 + $0x74] sm:$0xf]
        %v648 = vld [vmem:[%s540 + $0x78] sm:$0xf]
        %v649 = vld [vmem:[%s540 + $0x7c] sm:$0xf]
        %v650 = vld [vmem:[#allocation5] sm:$0xf]
        %v651 = vld [vmem:[#allocation5 + $0x4] sm:$0xf]
        %v652 = vld [vmem:[#allocation5 + $0x8] sm:$0xf]
        %v653 = vld [vmem:[#allocation5 + $0xc] sm:$0xf]
        %v654 = vld [vmem:[#allocation5 + $0x10] sm:$0xf]
        %v655 = vld [vmem:[#allocation5 + $0x14] sm:$0xf]
        %v656 = vld [vmem:[#allocation5 + $0x18] sm:$0xf]
        %v657 = vld [vmem:[#allocation5 + $0x1c] sm:$0xf]
        %v658 = vld [vmem:[#allocation5 + $0x20] sm:$0xf]
        %v659 = vld [vmem:[#allocation5 + $0x24] sm:$0xf]
        %v660 = vld [vmem:[#allocation5 + $0x28] sm:$0xf]
        %v661 = vld [vmem:[#allocation5 + $0x2c] sm:$0xf]
        %v662 = vld [vmem:[#allocation5 + $0x30] sm:$0xf]
        %v663 = vld [vmem:[#allocation5 + $0x34] sm:$0xf]
        %v664 = vld [vmem:[#allocation5 + $0x38] sm:$0xf]
        %v665 = vld [vmem:[#allocation5 + $0x3c] sm:$0xf]
        %v666 = vld [vmem:[%s2] sm:$0x1]
        %v668 = vlaneseq
        %v669 = vshrl.u32 %v668, 7
        %v670 = vsub.s32 0, %v669
        %v671 = vrot.slane %v666, %v670
        %v705 = vunpack.c.l.b16 %v618
        %v706 = vunpack.c.l.b16 %v619
        %v707 = vunpack.c.l.b16 %v620
        %v708 = vunpack.c.l.b16 %v621
        %v709 = vunpack.c.l.b16 %v622
        %v710 = vunpack.c.l.b16 %v623
        %v711 = vunpack.c.l.b16 %v624
        %v712 = vunpack.c.l.b16 %v625
        %v713 = vunpack.c.l.b16 %v626
        %v714 = vunpack.c.l.b16 %v627
        %v715 = vunpack.c.l.b16 %v628
        %v716 = vunpack.c.l.b16 %v629
        %v717 = vunpack.c.l.b16 %v630
        %v718 = vunpack.c.l.b16 %v631
        %v719 = vunpack.c.l.b16 %v632
        %v720 = vunpack.c.l.b16 %v633
        %v721 = vunpack.c.l.b16 %v634
        %v722 = vunpack.c.l.b16 %v635
        %v723 = vunpack.c.l.b16 %v636
        %v724 = vunpack.c.l.b16 %v637
        %v725 = vunpack.c.l.b16 %v638
        %v726 = vunpack.c.l.b16 %v639
        %v727 = vunpack.c.l.b16 %v640
        %v728 = vunpack.c.l.b16 %v641
        %v729 = vunpack.c.l.b16 %v642
        %v730 = vunpack.c.l.b16 %v643
        %v731 = vunpack.c.l.b16 %v644
        %v732 = vunpack.c.l.b16 %v645
        %v733 = vunpack.c.l.b16 %v646
        %v734 = vunpack.c.l.b16 %v647
        %v735 = vunpack.c.l.b16 %v648
        %v736 = vunpack.c.l.b16 %v649
        %v737 = vpack.c.b16 %v706, %v705
        %v738 = vpack.c.b16 %v708, %v707
        %v739 = vpack.c.b16 %v710, %v709
        %v740 = vpack.c.b16 %v712, %v711
        %v741 = vpack.c.b16 %v714, %v713
        %v742 = vpack.c.b16 %v716, %v715
        %v743 = vpack.c.b16 %v718, %v717
        %v744 = vpack.c.b16 %v720, %v719
        %v745 = vpack.c.b16 %v722, %v721
        %v746 = vpack.c.b16 %v724, %v723
        %v747 = vpack.c.b16 %v726, %v725
        %v748 = vpack.c.b16 %v728, %v727
        %v749 = vpack.c.b16 %v730, %v729
        %v750 = vpack.c.b16 %v732, %v731
        %v751 = vpack.c.b16 %v734, %v733
        %v752 = vpack.c.b16 %v736, %v735
        %v785 = vunpack.c.l.b16 %v650
        %v786 = vunpack.c.l.b16 %v651
        %v787 = vunpack.c.l.b16 %v652
        %v788 = vunpack.c.l.b16 %v653
        %v789 = vunpack.c.l.b16 %v654
        %v790 = vunpack.c.l.b16 %v655
        %v791 = vunpack.c.l.b16 %v656
        %v792 = vunpack.c.l.b16 %v657
        %v793 = vunpack.c.l.b16 %v658
        %v794 = vunpack.c.l.b16 %v659
        %v795 = vunpack.c.l.b16 %v660
        %v796 = vunpack.c.l.b16 %v661
        %v797 = vunpack.c.l.b16 %v662
        %v798 = vunpack.c.l.b16 %v663
        %v799 = vunpack.c.l.b16 %v664
        %v800 = vunpack.c.l.b16 %v665
        %v801 = vpack.c.b16 %v786, %v785
        %v802 = vpack.c.b16 %v788, %v787
        %v803 = vpack.c.b16 %v790, %v789
        %v804 = vpack.c.b16 %v792, %v791
        %v805 = vpack.c.b16 %v794, %v793
        %v806 = vpack.c.b16 %v796, %v795
        %v807 = vpack.c.b16 %v798, %v797
        %v808 = vpack.c.b16 %v800, %v799
        %817 = vmatprep.subr.bf16.mxu0 0
        %818 = vmatpush1.bf16.msra.mxu0 %v801
        %819 = vmatprep.subr.bf16.mxu0 0
        %820 = vmatpush1.bf16.msra.mxu0 %v802
        %821 = vmatprep.subr.bf16.mxu0 0
        %822 = vmatpush1.bf16.msra.mxu0 %v803
        %823 = vmatprep.subr.bf16.mxu0 0
        %824 = vmatpush1.bf16.msra.mxu0 %v804
        %825 = vmatprep.subr.bf16.mxu0 0
        %826 = vmatpush1.bf16.msra.mxu0 %v805
        %827 = vmatprep.subr.bf16.mxu0 0
        %828 = vmatpush1.bf16.msra.mxu0 %v806
        %829 = vmatprep.subr.bf16.mxu0 0
        %830 = vmatpush1.bf16.msra.mxu0 %v807
        %831 = vmatprep.subr.bf16.mxu0 0
        %832 = vmatpush1.bf16.msra.mxu0 %v808
        %833 = vmatprep.subr.bf16.mxu0 0
        %834 = vmatpush1.bf16.msra.mxu0 0
        %835 = vmatprep.subr.bf16.mxu0 0
        %836 = vmatpush1.bf16.msra.mxu0 0
        %837 = vmatprep.subr.bf16.mxu0 0
        %838 = vmatpush1.bf16.msra.mxu0 0
        %839 = vmatprep.subr.bf16.mxu0 0
        %840 = vmatpush1.bf16.msra.mxu0 0
        %841 = vmatprep.subr.bf16.mxu0 0
        %842 = vmatpush1.bf16.msra.mxu0 0
        %843 = vmatprep.subr.bf16.mxu0 0
        %844 = vmatpush1.bf16.msra.mxu0 0
        %845 = vmatprep.subr.bf16.mxu0 0
        %846 = vmatpush1.bf16.msra.mxu0 0
        %847 = vmatprep.subr.bf16.mxu0 0
        %848 = vmatpush1.bf16.msra.mxu0 0
        %849 = vmatprep.mubr.bf16.mxu0 0
        %850 = vmatmul.mubr.bf16.gmra.mrb[0].mxu0 %v737
        %v851 = vpop.f32.mrb[0].mxu0
        %v852 = vadd.f32 %v671, %v851
        %v853 = vpop.f32.mrb[0].mxu0
        %v854 = vpop.f32.mrb[0].mxu0
        %v855 = vadd.f32 %v671, %v854
        %v856 = vpop.f32.mrb[0].mxu0
        %857 = vmatprep.mubr.bf16.mxu0 0
        %858 = vmatmul.mubr.bf16.gmra.mrb[0].mxu0 %v738
        %v859 = vpop.f32.mrb[0].mxu0
        %v860 = vadd.f32 %v671, %v859
        %v861 = vpop.f32.mrb[0].mxu0
        %v862 = vpop.f32.mrb[0].mxu0
        %v863 = vadd.f32 %v671, %v862
        %v864 = vpop.f32.mrb[0].mxu0
        %865 = vmatprep.mubr.bf16.mxu0 0
        %866 = vmatmul.mubr.bf16.gmra.mrb[0].mxu0 %v739
        %v867 = vpop.f32.mrb[0].mxu0
        %v868 = vadd.f32 %v671, %v867
        %v869 = vpop.f32.mrb[0].mxu0
        %v870 = vpop.f32.mrb[0].mxu0
        %v871 = vadd.f32 %v671, %v870
        %v872 = vpop.f32.mrb[0].mxu0
        %873 = vmatprep.mubr.bf16.mxu0 0
        %874 = vmatmul.mubr.bf16.gmra.mrb[0].mxu0 %v740
        %v875 = vpop.f32.mrb[0].mxu0
        %v876 = vadd.f32 %v671, %v875
        %v877 = vpop.f32.mrb[0].mxu0
        %v878 = vpop.f32.mrb[0].mxu0
        %v879 = vadd.f32 %v671, %v878
        %v880 = vpop.f32.mrb[0].mxu0
        %881 = vmatprep.mubr.bf16.mxu0 0
        %882 = vmatmul.mubr.bf16.gmra.mrb[0].mxu0 %v741
        %v883 = vpop.f32.mrb[0].mxu0
        %v884 = vadd.f32 %v671, %v883
        %v885 = vpop.f32.mrb[0].mxu0
        %v886 = vpop.f32.mrb[0].mxu0
        %v887 = vadd.f32 %v671, %v886
        %v888 = vpop.f32.mrb[0].mxu0
        %889 = vmatprep.mubr.bf16.mxu0 0
        %890 = vmatmul.mubr.bf16.gmra.mrb[0].mxu0 %v742
        %v891 = vpop.f32.mrb[0].mxu0
        %v892 = vadd.f32 %v671, %v891
        %v893 = vpop.f32.mrb[0].mxu0
        %v894 = vpop.f32.mrb[0].mxu0
        %v895 = vadd.f32 %v671, %v894
        %v896 = vpop.f32.mrb[0].mxu0
        %897 = vmatprep.mubr.bf16.mxu0 0
        %898 = vmatmul.mubr.bf16.gmra.mrb[0].mxu0 %v743
        %v899 = vpop.f32.mrb[0].mxu0
        %v900 = vadd.f32 %v671, %v899
        %v901 = vpop.f32.mrb[0].mxu0
        %v902 = vpop.f32.mrb[0].mxu0
        %v903 = vadd.f32 %v671, %v902
        %v904 = vpop.f32.mrb[0].mxu0
        %905 = vmatprep.mubr.bf16.mxu0 0
        %906 = vmatmul.mubr.bf16.gmra.mrb[0].mxu0 %v744
        %v907 = vpop.f32.mrb[0].mxu0
        %v908 = vadd.f32 %v671, %v907
        %v909 = vpop.f32.mrb[0].mxu0
        %v910 = vpop.f32.mrb[0].mxu0
        %v911 = vadd.f32 %v671, %v910
        %v912 = vpop.f32.mrb[0].mxu0
        %913 = vmatprep.mubr.bf16.mxu0 0
        %914 = vmatmul.mubr.bf16.gmra.mrb[0].mxu0 %v745
        %v915 = vpop.f32.mrb[0].mxu0
        %v916 = vadd.f32 %v671, %v915
        %v917 = vpop.f32.mrb[0].mxu0
        %v918 = vpop.f32.mrb[0].mxu0
        %v919 = vadd.f32 %v671, %v918
        %v920 = vpop.f32.mrb[0].mxu0
        %921 = vmatprep.mubr.bf16.mxu0 0
        %922 = vmatmul.mubr.bf16.gmra.mrb[0].mxu0 %v746
        %v923 = vpop.f32.mrb[0].mxu0
        %v924 = vadd.f32 %v671, %v923
        %v925 = vpop.f32.mrb[0].mxu0
        %v926 = vpop.f32.mrb[0].mxu0
        %v927 = vadd.f32 %v671, %v926
        %v928 = vpop.f32.mrb[0].mxu0
        %929 = vmatprep.mubr.bf16.mxu0 0
        %930 = vmatmul.mubr.bf16.gmra.mrb[0].mxu0 %v747
        %v931 = vpop.f32.mrb[0].mxu0
        %v932 = vadd.f32 %v671, %v931
        %v933 = vpop.f32.mrb[0].mxu0
        %v934 = vpop.f32.mrb[0].mxu0
        %v935 = vadd.f32 %v671, %v934
        %v936 = vpop.f32.mrb[0].mxu0
        %937 = vmatprep.mubr.bf16.mxu0 0
        %938 = vmatmul.mubr.bf16.gmra.mrb[0].mxu0 %v748
        %v939 = vpop.f32.mrb[0].mxu0
        %v940 = vadd.f32 %v671, %v939
        %v941 = vpop.f32.mrb[0].mxu0
        %v942 = vpop.f32.mrb[0].mxu0
        %v943 = vadd.f32 %v671, %v942
        %v944 = vpop.f32.mrb[0].mxu0
        %945 = vmatprep.mubr.bf16.mxu0 0
        %946 = vmatmul.mubr.bf16.gmra.mrb[0].mxu0 %v749
        %v947 = vpop.f32.mrb[0].mxu0
        %v948 = vadd.f32 %v671, %v947
        %v949 = vpop.f32.mrb[0].mxu0
        %v950 = vpop.f32.mrb[0].mxu0
        %v951 = vadd.f32 %v671, %v950
        %v952 = vpop.f32.mrb[0].mxu0
        %953 = vmatprep.mubr.bf16.mxu0 0
        %954 = vmatmul.mubr.bf16.gmra.mrb[0].mxu0 %v750
        %v955 = vpop.f32.mrb[0].mxu0
        %v956 = vadd.f32 %v671, %v955
        %v957 = vpop.f32.mrb[0].mxu0
        %v958 = vpop.f32.mrb[0].mxu0
        %v959 = vadd.f32 %v671, %v958
        %v960 = vpop.f32.mrb[0].mxu0
        %961 = vmatprep.mubr.bf16.mxu0 0
        %962 = vmatmul.mubr.bf16.gmra.mrb[0].mxu0 %v751
        %v963 = vpop.f32.mrb[0].mxu0
        %v964 = vadd.f32 %v671, %v963
        %v965 = vpop.f32.mrb[0].mxu0
        %v966 = vpop.f32.mrb[0].mxu0
        %v967 = vadd.f32 %v671, %v966
        %v968 = vpop.f32.mrb[0].mxu0
        %969 = vmatprep.mubr.bf16.mxu0 0
        %970 = vmatmul.mubr.bf16.gmra.mrb[0].mxu0 %v752
        %v971 = vpop.f32.mrb[0].mxu0
        %v972 = vadd.f32 %v671, %v971
        %v973 = vpop.f32.mrb[0].mxu0
        %v974 = vpop.f32.mrb[0].mxu0
        %v975 = vadd.f32 %v671, %v974
        %v976 = vpop.f32.mrb[0].mxu0
        %977 = vdwg.mxu0
        %v978 = vtanh.pop %v852
        %v979 = vtanh.pop %v855
        %v980 = vtanh.pop %v860
        %v981 = vtanh.pop %v863
        %v982 = vtanh.pop %v868
        %v983 = vtanh.pop %v871
        %v984 = vtanh.pop %v876
        %v985 = vtanh.pop %v879
        %v986 = vtanh.pop %v884
        %v987 = vtanh.pop %v887
        %v988 = vtanh.pop %v892
        %v989 = vtanh.pop %v895
        %v990 = vtanh.pop %v900
        %v991 = vtanh.pop %v903
        %v992 = vtanh.pop %v908
        %v993 = vtanh.pop %v911
        %v994 = vtanh.pop %v916
        %v995 = vtanh.pop %v919
        %v996 = vtanh.pop %v924
        %v997 = vtanh.pop %v927
        %v998 = vtanh.pop %v932
        %v999 = vtanh.pop %v935
        %v1000 = vtanh.pop %v940
        %v1001 = vtanh.pop %v943
        %v1002 = vtanh.pop %v948
        %v1003 = vtanh.pop %v951
        %v1004 = vtanh.pop %v956
        %v1005 = vtanh.pop %v959
        %v1006 = vtanh.pop %v964
        %v1007 = vtanh.pop %v967
        %v1008 = vtanh.pop %v972
        %v1009 = vtanh.pop %v975
        %v1010 = vpack.c.bf16 %v979, %v978
        %v1011 = vpack.c.bf16 %v981, %v980
        %v1012 = vpack.c.bf16 %v983, %v982
        %v1013 = vpack.c.bf16 %v985, %v984
        %v1014 = vpack.c.bf16 %v987, %v986
        %v1015 = vpack.c.bf16 %v989, %v988
        %v1016 = vpack.c.bf16 %v991, %v990
        %v1017 = vpack.c.bf16 %v993, %v992
        %v1018 = vpack.c.bf16 %v995, %v994
        %v1019 = vpack.c.bf16 %v997, %v996
        %v1020 = vpack.c.bf16 %v999, %v998
        %v1021 = vpack.c.bf16 %v1001, %v1000
        %v1022 = vpack.c.bf16 %v1003, %v1002
        %v1023 = vpack.c.bf16 %v1005, %v1004
        %v1024 = vpack.c.bf16 %v1007, %v1006
        %v1025 = vpack.c.bf16 %v1009, %v1008
        %v1026 = vld [vmem:[#allocation7] sm:$0xf]
        %v1027 = vld [vmem:[#allocation7 + $0x4] sm:$0xf]
        %v1028 = vld [vmem:[#allocation7 + $0x8] sm:$0xf]
        %v1029 = vld [vmem:[#allocation7 + $0xc] sm:$0xf]
        %v1030 = vld [vmem:[#allocation7 + $0x10] sm:$0xf]
        %v1031 = vld [vmem:[#allocation7 + $0x14] sm:$0xf]
        %v1032 = vld [vmem:[#allocation7 + $0x18] sm:$0xf]
        %v1033 = vld [vmem:[#allocation7 + $0x1c] sm:$0xf]
        %v1034 = vld [vmem:[#allocation7 + $0x20] sm:$0xf]
        %v1035 = vld [vmem:[#allocation7 + $0x24] sm:$0xf]
        %v1036 = vld [vmem:[#allocation7 + $0x28] sm:$0xf]
        %v1037 = vld [vmem:[#allocation7 + $0x2c] sm:$0xf]
        %v1038 = vld [vmem:[#allocation7 + $0x30] sm:$0xf]
        %v1039 = vld [vmem:[#allocation7 + $0x34] sm:$0xf]
        %v1040 = vld [vmem:[#allocation7 + $0x38] sm:$0xf]
        %v1041 = vld [vmem:[#allocation7 + $0x3c] sm:$0xf]
        %v1042 = vld [vmem:[%s4] sm:$0x1]
        %v1044 = vlaneseq
        %v1045 = vshrl.u32 %v1044, 7
        %v1046 = vsub.s32 0, %v1045
        %v1047 = vrot.slane %v1042, %v1046
        %v1065 = vunpack.c.l.b16 %v1026
        %v1066 = vunpack.c.l.b16 %v1027
        %v1067 = vunpack.c.l.b16 %v1028
        %v1068 = vunpack.c.l.b16 %v1029
        %v1069 = vunpack.c.l.b16 %v1030
        %v1070 = vunpack.c.l.b16 %v1031
        %v1071 = vunpack.c.l.b16 %v1032
        %v1072 = vunpack.c.l.b16 %v1033
        %v1073 = vunpack.c.l.b16 %v1034
        %v1074 = vunpack.c.l.b16 %v1035
        %v1075 = vunpack.c.l.b16 %v1036
        %v1076 = vunpack.c.l.b16 %v1037
        %v1077 = vunpack.c.l.b16 %v1038
        %v1078 = vunpack.c.l.b16 %v1039
        %v1079 = vunpack.c.l.b16 %v1040
        %v1080 = vunpack.c.l.b16 %v1041
        %v1081 = vpack.c.b16 %v1066, %v1065
        %v1082 = vpack.c.b16 %v1068, %v1067
        %v1083 = vpack.c.b16 %v1070, %v1069
        %v1084 = vpack.c.b16 %v1072, %v1071
        %v1085 = vpack.c.b16 %v1074, %v1073
        %v1086 = vpack.c.b16 %v1076, %v1075
        %v1087 = vpack.c.b16 %v1078, %v1077
        %v1088 = vpack.c.b16 %v1080, %v1079
        %1097 = vmatprep.subr.bf16.mxu0 0
        %1098 = vmatpush1.bf16.msra.mxu0 %v1081
        %1099 = vmatprep.subr.bf16.mxu0 0
        %1100 = vmatpush1.bf16.msra.mxu0 %v1082
        %1101 = vmatprep.subr.bf16.mxu0 0
        %1102 = vmatpush1.bf16.msra.mxu0 %v1083
        %1103 = vmatprep.subr.bf16.mxu0 0
        %1104 = vmatpush1.bf16.msra.mxu0 %v1084
        %1105 = vmatprep.subr.bf16.mxu0 0
        %1106 = vmatpush1.bf16.msra.mxu0 %v1085
        %1107 = vmatprep.subr.bf16.mxu0 0
        %1108 = vmatpush1.bf16.msra.mxu0 %v1086
        %1109 = vmatprep.subr.bf16.mxu0 0
        %1110 = vmatpush1.bf16.msra.mxu0 %v1087
        %1111 = vmatprep.subr.bf16.mxu0 0
        %1112 = vmatpush1.bf16.msra.mxu0 %v1088
        %1113 = vmatprep.subr.bf16.mxu0 0
        %1114 = vmatpush1.bf16.msra.mxu0 0
        %1115 = vmatprep.subr.bf16.mxu0 0
        %1116 = vmatpush1.bf16.msra.mxu0 0
        %1117 = vmatprep.subr.bf16.mxu0 0
        %1118 = vmatpush1.bf16.msra.mxu0 0
        %1119 = vmatprep.subr.bf16.mxu0 0
        %1120 = vmatpush1.bf16.msra.mxu0 0
        %1121 = vmatprep.subr.bf16.mxu0 0
        %1122 = vmatpush1.bf16.msra.mxu0 0
        %1123 = vmatprep.subr.bf16.mxu0 0
        %1124 = vmatpush1.bf16.msra.mxu0 0
        %1125 = vmatprep.subr.bf16.mxu0 0
        %1126 = vmatpush1.bf16.msra.mxu0 0
        %1127 = vmatprep.subr.bf16.mxu0 0
        %1128 = vmatpush1.bf16.msra.mxu0 0
        %1129 = vmatprep.mubr.bf16.mxu0 0
        %1130 = vmatmul.mubr.bf16.gmra.mrb[0].mxu0 %v1010
        %v1131 = vpop.f32.mrb[0].mxu0
        %v1132 = vadd.f32 %v1047, %v1131
        %v1133 = vpop.f32.mrb[0].mxu0
        %v1134 = vpop.f32.mrb[0].mxu0
        %v1135 = vadd.f32 %v1047, %v1134
        %v1136 = vpop.f32.mrb[0].mxu0
        %1137 = vmatprep.mubr.bf16.mxu0 0
        %1138 = vmatmul.mubr.bf16.gmra.mrb[0].mxu0 %v1011
        %v1139 = vpop.f32.mrb[0].mxu0
        %v1140 = vadd.f32 %v1047, %v1139
        %v1141 = vpop.f32.mrb[0].mxu0
        %v1142 = vpop.f32.mrb[0].mxu0
        %v1143 = vadd.f32 %v1047, %v1142
        %v1144 = vpop.f32.mrb[0].mxu0
        %1145 = vmatprep.mubr.bf16.mxu0 0
        %1146 = vmatmul.mubr.bf16.gmra.mrb[0].mxu0 %v1012
        %v1147 = vpop.f32.mrb[0].mxu0
        %v1148 = vadd.f32 %v1047, %v1147
        %v1149 = vpop.f32.mrb[0].mxu0
        %v1150 = vpop.f32.mrb[0].mxu0
        %v1151 = vadd.f32 %v1047, %v1150
        %v1152 = vpop.f32.mrb[0].mxu0
        %1153 = vmatprep.mubr.bf16.mxu0 0
        %1154 = vmatmul.mubr.bf16.gmra.mrb[0].mxu0 %v1013
        %v1155 = vpop.f32.mrb[0].mxu0
        %v1156 = vadd.f32 %v1047, %v1155
        %v1157 = vpop.f32.mrb[0].mxu0
        %v1158 = vpop.f32.mrb[0].mxu0
        %v1159 = vadd.f32 %v1047, %v1158
        %v1160 = vpop.f32.mrb[0].mxu0
        %1161 = vmatprep.mubr.bf16.mxu0 0
        %1162 = vmatmul.mubr.bf16.gmra.mrb[0].mxu0 %v1014
        %v1163 = vpop.f32.mrb[0].mxu0
        %v1164 = vadd.f32 %v1047, %v1163
        %v1165 = vpop.f32.mrb[0].mxu0
        %v1166 = vpop.f32.mrb[0].mxu0
        %v1167 = vadd.f32 %v1047, %v1166
        %v1168 = vpop.f32.mrb[0].mxu0
        %1169 = vmatprep.mubr.bf16.mxu0 0
        %1170 = vmatmul.mubr.bf16.gmra.mrb[0].mxu0 %v1015
        %v1171 = vpop.f32.mrb[0].mxu0
        %v1172 = vadd.f32 %v1047, %v1171
        %v1173 = vpop.f32.mrb[0].mxu0
        %v1174 = vpop.f32.mrb[0].mxu0
        %v1175 = vadd.f32 %v1047, %v1174
        %v1176 = vpop.f32.mrb[0].mxu0
        %1177 = vmatprep.mubr.bf16.mxu0 0
        %1178 = vmatmul.mubr.bf16.gmra.mrb[0].mxu0 %v1016
        %v1179 = vpop.f32.mrb[0].mxu0
        %v1180 = vadd.f32 %v1047, %v1179
        %v1181 = vpop.f32.mrb[0].mxu0
        %v1182 = vpop.f32.mrb[0].mxu0
        %v1183 = vadd.f32 %v1047, %v1182
        %v1184 = vpop.f32.mrb[0].mxu0
        %1185 = vmatprep.mubr.bf16.mxu0 0
        %1186 = vmatmul.mubr.bf16.gmra.mrb[0].mxu0 %v1017
        %v1187 = vpop.f32.mrb[0].mxu0
        %v1188 = vadd.f32 %v1047, %v1187
        %v1189 = vpop.f32.mrb[0].mxu0
        %v1190 = vpop.f32.mrb[0].mxu0
        %v1191 = vadd.f32 %v1047, %v1190
        %v1192 = vpop.f32.mrb[0].mxu0
        %1193 = vmatprep.mubr.bf16.mxu0 0
        %1194 = vmatmul.mubr.bf16.gmra.mrb[0].mxu0 %v1018
        %v1195 = vpop.f32.mrb[0].mxu0
        %v1196 = vadd.f32 %v1047, %v1195
        %v1197 = vpop.f32.mrb[0].mxu0
        %v1198 = vpop.f32.mrb[0].mxu0
        %v1199 = vadd.f32 %v1047, %v1198
        %v1200 = vpop.f32.mrb[0].mxu0
        %1201 = vmatprep.mubr.bf16.mxu0 0
        %1202 = vmatmul.mubr.bf16.gmra.mrb[0].mxu0 %v1019
        %v1203 = vpop.f32.mrb[0].mxu0
        %v1204 = vadd.f32 %v1047, %v1203
        %v1205 = vpop.f32.mrb[0].mxu0
        %v1206 = vpop.f32.mrb[0].mxu0
        %v1207 = vadd.f32 %v1047, %v1206
        %v1208 = vpop.f32.mrb[0].mxu0
        %1209 = vmatprep.mubr.bf16.mxu0 0
        %1210 = vmatmul.mubr.bf16.gmra.mrb[0].mxu0 %v1020
        %v1211 = vpop.f32.mrb[0].mxu0
        %v1212 = vadd.f32 %v1047, %v1211
        %v1213 = vpop.f32.mrb[0].mxu0
        %v1214 = vpop.f32.mrb[0].mxu0
        %v1215 = vadd.f32 %v1047, %v1214
        %v1216 = vpop.f32.mrb[0].mxu0
        %1217 = vmatprep.mubr.bf16.mxu0 0
        %1218 = vmatmul.mubr.bf16.gmra.mrb[0].mxu0 %v1021
        %v1219 = vpop.f32.mrb[0].mxu0
        %v1220 = vadd.f32 %v1047, %v1219
        %v1221 = vpop.f32.mrb[0].mxu0
        %v1222 = vpop.f32.mrb[0].mxu0
        %v1223 = vadd.f32 %v1047, %v1222
        %v1224 = vpop.f32.mrb[0].mxu0
        %1225 = vmatprep.mubr.bf16.mxu0 0
        %1226 = vmatmul.mubr.bf16.gmra.mrb[0].mxu0 %v1022
        %v1227 = vpop.f32.mrb[0].mxu0
        %v1228 = vadd.f32 %v1047, %v1227
        %v1229 = vpop.f32.mrb[0].mxu0
        %v1230 = vpop.f32.mrb[0].mxu0
        %v1231 = vadd.f32 %v1047, %v1230
        %v1232 = vpop.f32.mrb[0].mxu0
        %1233 = vmatprep.mubr.bf16.mxu0 0
        %1234 = vmatmul.mubr.bf16.gmra.mrb[0].mxu0 %v1023
        %v1235 = vpop.f32.mrb[0].mxu0
        %v1236 = vadd.f32 %v1047, %v1235
        %v1237 = vpop.f32.mrb[0].mxu0
        %v1238 = vpop.f32.mrb[0].mxu0
        %v1239 = vadd.f32 %v1047, %v1238
        %v1240 = vpop.f32.mrb[0].mxu0
        %1241 = vmatprep.mubr.bf16.mxu0 0
        %1242 = vmatmul.mubr.bf16.gmra.mrb[0].mxu0 %v1024
        %v1243 = vpop.f32.mrb[0].mxu0
        %v1244 = vadd.f32 %v1047, %v1243
        %v1245 = vpop.f32.mrb[0].mxu0
        %v1246 = vpop.f32.mrb[0].mxu0
        %v1247 = vadd.f32 %v1047, %v1246
        %v1248 = vpop.f32.mrb[0].mxu0
        %1249 = vmatprep.mubr.bf16.mxu0 0
        %1250 = vmatmul.mubr.bf16.gmra.mrb[0].mxu0 %v1025
        %v1251 = vpop.f32.mrb[0].mxu0
        %v1252 = vadd.f32 %v1047, %v1251
        %v1253 = vpop.f32.mrb[0].mxu0
        %v1254 = vpop.f32.mrb[0].mxu0
        %v1255 = vadd.f32 %v1047, %v1254
        %v1256 = vpop.f32.mrb[0].mxu0
        %1257 = vdwg.mxu0
        %v1258 = vtanh.pop %v1132
        %v1259 = vtanh.pop %v1135
        %v1260 = vtanh.pop %v1140
        %v1261 = vtanh.pop %v1143
        %v1262 = vtanh.pop %v1148
        %v1263 = vtanh.pop %v1151
        %v1264 = vtanh.pop %v1156
        %v1265 = vtanh.pop %v1159
        %v1266 = vtanh.pop %v1164
        %v1267 = vtanh.pop %v1167
        %v1268 = vtanh.pop %v1172
        %v1269 = vtanh.pop %v1175
        %v1270 = vtanh.pop %v1180
        %v1271 = vtanh.pop %v1183
        %v1272 = vtanh.pop %v1188
        %v1273 = vtanh.pop %v1191
        %v1274 = vtanh.pop %v1196
        %v1275 = vtanh.pop %v1199
        %v1276 = vtanh.pop %v1204
        %v1277 = vtanh.pop %v1207
        %v1278 = vtanh.pop %v1212
        %v1279 = vtanh.pop %v1215
        %v1280 = vtanh.pop %v1220
        %v1281 = vtanh.pop %v1223
        %v1282 = vtanh.pop %v1228
        %v1283 = vtanh.pop %v1231
        %v1284 = vtanh.pop %v1236
        %v1285 = vtanh.pop %v1239
        %v1286 = vtanh.pop %v1244
        %v1287 = vtanh.pop %v1247
        %v1288 = vtanh.pop %v1252
        %v1289 = vtanh.pop %v1255
        %v1290 = vpack.c.bf16 %v1259, %v1258
        %v1291 = vpack.c.bf16 %v1261, %v1260
        %v1292 = vpack.c.bf16 %v1263, %v1262
        %v1293 = vpack.c.bf16 %v1265, %v1264
        %v1294 = vpack.c.bf16 %v1267, %v1266
        %v1295 = vpack.c.bf16 %v1269, %v1268
        %v1296 = vpack.c.bf16 %v1271, %v1270
        %v1297 = vpack.c.bf16 %v1273, %v1272
        %v1298 = vpack.c.bf16 %v1275, %v1274
        %v1299 = vpack.c.bf16 %v1277, %v1276
        %v1300 = vpack.c.bf16 %v1279, %v1278
        %v1301 = vpack.c.bf16 %v1281, %v1280
        %v1302 = vpack.c.bf16 %v1283, %v1282
        %v1303 = vpack.c.bf16 %v1285, %v1284
        %v1304 = vpack.c.bf16 %v1287, %v1286
        %v1305 = vpack.c.bf16 %v1289, %v1288
        %v1306 = vld [vmem:[#allocation8] sm:$0xf]
        %v1307 = vld [vmem:[#allocation8 + $0x4] sm:$0xf]
        %v1308 = vld [vmem:[#allocation8 + $0x8] sm:$0xf]
        %v1309 = vld [vmem:[#allocation8 + $0xc] sm:$0xf]
        %v1310 = vld [vmem:[#allocation8 + $0x10] sm:$0xf]
        %v1311 = vld [vmem:[#allocation8 + $0x14] sm:$0xf]
        %v1312 = vld [vmem:[#allocation8 + $0x18] sm:$0xf]
        %v1313 = vld [vmem:[#allocation8 + $0x1c] sm:$0xf]
        %v1314 = vld [vmem:[#allocation8 + $0x20] sm:$0xf]
        %v1315 = vld [vmem:[#allocation8 + $0x24] sm:$0xf]
        %v1316 = vld [vmem:[#allocation8 + $0x28] sm:$0xf]
        %v1317 = vld [vmem:[#allocation8 + $0x2c] sm:$0xf]
        %v1318 = vld [vmem:[#allocation8 + $0x30] sm:$0xf]
        %v1319 = vld [vmem:[#allocation8 + $0x34] sm:$0xf]
        %v1320 = vld [vmem:[#allocation8 + $0x38] sm:$0xf]
        %v1321 = vld [vmem:[#allocation8 + $0x3c] sm:$0xf]
        %v1322 = vld [vmem:[%s6] sm:$0x1]
        %v1324 = vlaneseq
        %v1325 = vshrl.u32 %v1324, 7
        %v1326 = vsub.s32 0, %v1325
        %v1327 = vrot.slane %v1322, %v1326
        %v1345 = vunpack.c.l.b16 %v1306
        %v1346 = vunpack.c.l.b16 %v1307
        %v1347 = vunpack.c.l.b16 %v1308
        %v1348 = vunpack.c.l.b16 %v1309
        %v1349 = vunpack.c.l.b16 %v1310
        %v1350 = vunpack.c.l.b16 %v1311
        %v1351 = vunpack.c.l.b16 %v1312
        %v1352 = vunpack.c.l.b16 %v1313
        %v1353 = vunpack.c.l.b16 %v1314
        %v1354 = vunpack.c.l.b16 %v1315
        %v1355 = vunpack.c.l.b16 %v1316
        %v1356 = vunpack.c.l.b16 %v1317
        %v1357 = vunpack.c.l.b16 %v1318
        %v1358 = vunpack.c.l.b16 %v1319
        %v1359 = vunpack.c.l.b16 %v1320
        %v1360 = vunpack.c.l.b16 %v1321
        %v1361 = vpack.c.b16 %v1346, %v1345
        %v1362 = vpack.c.b16 %v1348, %v1347
        %v1363 = vpack.c.b16 %v1350, %v1349
        %v1364 = vpack.c.b16 %v1352, %v1351
        %v1365 = vpack.c.b16 %v1354, %v1353
        %v1366 = vpack.c.b16 %v1356, %v1355
        %v1367 = vpack.c.b16 %v1358, %v1357
        %v1368 = vpack.c.b16 %v1360, %v1359
        %1377 = vmatprep.subr.bf16.mxu0 0
        %1378 = vmatpush1.bf16.msra.mxu0 %v1361
        %1379 = vmatprep.subr.bf16.mxu0 0
        %1380 = vmatpush1.bf16.msra.mxu0 %v1362
        %1381 = vmatprep.subr.bf16.mxu0 0
        %1382 = vmatpush1.bf16.msra.mxu0 %v1363
        %1383 = vmatprep.subr.bf16.mxu0 0
        %1384 = vmatpush1.bf16.msra.mxu0 %v1364
        %1385 = vmatprep.subr.bf16.mxu0 0
        %1386 = vmatpush1.bf16.msra.mxu0 %v1365
        %1387 = vmatprep.subr.bf16.mxu0 0
        %1388 = vmatpush1.bf16.msra.mxu0 %v1366
        %1389 = vmatprep.subr.bf16.mxu0 0
        %1390 = vmatpush1.bf16.msra.mxu0 %v1367
        %1391 = vmatprep.subr.bf16.mxu0 0
        %1392 = vmatpush1.bf16.msra.mxu0 %v1368
        %1393 = vmatprep.subr.bf16.mxu0 0
        %1394 = vmatpush1.bf16.msra.mxu0 0
        %1395 = vmatprep.subr.bf16.mxu0 0
        %1396 = vmatpush1.bf16.msra.mxu0 0
        %1397 = vmatprep.subr.bf16.mxu0 0
        %1398 = vmatpush1.bf16.msra.mxu0 0
        %1399 = vmatprep.subr.bf16.mxu0 0
        %1400 = vmatpush1.bf16.msra.mxu0 0
        %1401 = vmatprep.subr.bf16.mxu0 0
        %1402 = vmatpush1.bf16.msra.mxu0 0
        %1403 = vmatprep.subr.bf16.mxu0 0
        %1404 = vmatpush1.bf16.msra.mxu0 0
        %1405 = vmatprep.subr.bf16.mxu0 0
        %1406 = vmatpush1.bf16.msra.mxu0 0
        %1407 = vmatprep.subr.bf16.mxu0 0
        %1408 = vmatpush1.bf16.msra.mxu0 0
        %1409 = vmatprep.mubr.bf16.mxu0 0
        %1410 = vmatmul.mubr.bf16.gmra.mrb[0].mxu0 %v1290
        %v1411 = vpop.f32.mrb[0].mxu0
        %v1412 = vadd.f32 %v1327, %v1411
        %v1413 = vpop.f32.mrb[0].mxu0
        %v1414 = vpop.f32.mrb[0].mxu0
        %v1415 = vadd.f32 %v1327, %v1414
        %v1416 = vpop.f32.mrb[0].mxu0
        %1417 = vmatprep.mubr.bf16.mxu0 0
        %1418 = vmatmul.mubr.bf16.gmra.mrb[0].mxu0 %v1291
        %v1419 = vpop.f32.mrb[0].mxu0
        %v1420 = vadd.f32 %v1327, %v1419
        %v1421 = vpop.f32.mrb[0].mxu0
        %v1422 = vpop.f32.mrb[0].mxu0
        %v1423 = vadd.f32 %v1327, %v1422
        %v1424 = vpop.f32.mrb[0].mxu0
        %1425 = vmatprep.mubr.bf16.mxu0 0
        %1426 = vmatmul.mubr.bf16.gmra.mrb[0].mxu0 %v1292
        %v1427 = vpop.f32.mrb[0].mxu0
        %v1428 = vadd.f32 %v1327, %v1427
        %v1429 = vpop.f32.mrb[0].mxu0
        %v1430 = vpop.f32.mrb[0].mxu0
        %v1431 = vadd.f32 %v1327, %v1430
        %v1432 = vpop.f32.mrb[0].mxu0
        %1433 = vmatprep.mubr.bf16.mxu0 0
        %1434 = vmatmul.mubr.bf16.gmra.mrb[0].mxu0 %v1293
        %v1435 = vpop.f32.mrb[0].mxu0
        %v1436 = vadd.f32 %v1327, %v1435
        %v1437 = vpop.f32.mrb[0].mxu0
        %v1438 = vpop.f32.mrb[0].mxu0
        %v1439 = vadd.f32 %v1327, %v1438
        %v1440 = vpop.f32.mrb[0].mxu0
        %1441 = vmatprep.mubr.bf16.mxu0 0
        %1442 = vmatmul.mubr.bf16.gmra.mrb[0].mxu0 %v1294
        %v1443 = vpop.f32.mrb[0].mxu0
        %v1444 = vadd.f32 %v1327, %v1443
        %v1445 = vpop.f32.mrb[0].mxu0
        %v1446 = vpop.f32.mrb[0].mxu0
        %v1447 = vadd.f32 %v1327, %v1446
        %v1448 = vpop.f32.mrb[0].mxu0
        %1449 = vmatprep.mubr.bf16.mxu0 0
        %1450 = vmatmul.mubr.bf16.gmra.mrb[0].mxu0 %v1295
        %v1451 = vpop.f32.mrb[0].mxu0
        %v1452 = vadd.f32 %v1327, %v1451
        %v1453 = vpop.f32.mrb[0].mxu0
        %v1454 = vpop.f32.mrb[0].mxu0
        %v1455 = vadd.f32 %v1327, %v1454
        %v1456 = vpop.f32.mrb[0].mxu0
        %1457 = vmatprep.mubr.bf16.mxu0 0
        %1458 = vmatmul.mubr.bf16.gmra.mrb[0].mxu0 %v1296
        %v1459 = vpop.f32.mrb[0].mxu0
        %v1460 = vadd.f32 %v1327, %v1459
        %v1461 = vpop.f32.mrb[0].mxu0
        %v1462 = vpop.f32.mrb[0].mxu0
        %v1463 = vadd.f32 %v1327, %v1462
        %v1464 = vpop.f32.mrb[0].mxu0
        %1465 = vmatprep.mubr.bf16.mxu0 0
        %1466 = vmatmul.mubr.bf16.gmra.mrb[0].mxu0 %v1297
        %v1467 = vpop.f32.mrb[0].mxu0
        %v1468 = vadd.f32 %v1327, %v1467
        %v1469 = vpop.f32.mrb[0].mxu0
        %v1470 = vpop.f32.mrb[0].mxu0
        %v1471 = vadd.f32 %v1327, %v1470
        %v1472 = vpop.f32.mrb[0].mxu0
        %1473 = vmatprep.mubr.bf16.mxu0 0
        %1474 = vmatmul.mubr.bf16.gmra.mrb[0].mxu0 %v1298
        %v1475 = vpop.f32.mrb[0].mxu0
        %v1476 = vadd.f32 %v1327, %v1475
        %v1477 = vpop.f32.mrb[0].mxu0
        %v1478 = vpop.f32.mrb[0].mxu0
        %v1479 = vadd.f32 %v1327, %v1478
        %v1480 = vpop.f32.mrb[0].mxu0
        %1481 = vmatprep.mubr.bf16.mxu0 0
        %1482 = vmatmul.mubr.bf16.gmra.mrb[0].mxu0 %v1299
        %v1483 = vpop.f32.mrb[0].mxu0
        %v1484 = vadd.f32 %v1327, %v1483
        %v1485 = vpop.f32.mrb[0].mxu0
        %v1486 = vpop.f32.mrb[0].mxu0
        %v1487 = vadd.f32 %v1327, %v1486
        %v1488 = vpop.f32.mrb[0].mxu0
        %1489 = vmatprep.mubr.bf16.mxu0 0
        %1490 = vmatmul.mubr.bf16.gmra.mrb[0].mxu0 %v1300
        %v1491 = vpop.f32.mrb[0].mxu0
        %v1492 = vadd.f32 %v1327, %v1491
        %v1493 = vpop.f32.mrb[0].mxu0
        %v1494 = vpop.f32.mrb[0].mxu0
        %v1495 = vadd.f32 %v1327, %v1494
        %v1496 = vpop.f32.mrb[0].mxu0
        %1497 = vmatprep.mubr.bf16.mxu0 0
        %1498 = vmatmul.mubr.bf16.gmra.mrb[0].mxu0 %v1301
        %v1499 = vpop.f32.mrb[0].mxu0
        %v1500 = vadd.f32 %v1327, %v1499
        %v1501 = vpop.f32.mrb[0].mxu0
        %v1502 = vpop.f32.mrb[0].mxu0
        %v1503 = vadd.f32 %v1327, %v1502
        %v1504 = vpop.f32.mrb[0].mxu0
        %1505 = vmatprep.mubr.bf16.mxu0 0
        %1506 = vmatmul.mubr.bf16.gmra.mrb[0].mxu0 %v1302
        %v1507 = vpop.f32.mrb[0].mxu0
        %v1508 = vadd.f32 %v1327, %v1507
        %v1509 = vpop.f32.mrb[0].mxu0
        %v1510 = vpop.f32.mrb[0].mxu0
        %v1511 = vadd.f32 %v1327, %v1510
        %v1512 = vpop.f32.mrb[0].mxu0
        %1513 = vmatprep.mubr.bf16.mxu0 0
        %1514 = vmatmul.mubr.bf16.gmra.mrb[0].mxu0 %v1303
        %v1515 = vpop.f32.mrb[0].mxu0
        %v1516 = vadd.f32 %v1327, %v1515
        %v1517 = vpop.f32.mrb[0].mxu0
        %v1518 = vpop.f32.mrb[0].mxu0
        %v1519 = vadd.f32 %v1327, %v1518
        %v1520 = vpop.f32.mrb[0].mxu0
        %1521 = vmatprep.mubr.bf16.mxu0 0
        %1522 = vmatmul.mubr.bf16.gmra.mrb[0].mxu0 %v1304
        %v1523 = vpop.f32.mrb[0].mxu0
        %v1524 = vadd.f32 %v1327, %v1523
        %v1525 = vpop.f32.mrb[0].mxu0
        %v1526 = vpop.f32.mrb[0].mxu0
        %v1527 = vadd.f32 %v1327, %v1526
        %v1528 = vpop.f32.mrb[0].mxu0
        %1529 = vmatprep.mubr.bf16.mxu0 0
        %1530 = vmatmul.mubr.bf16.gmra.mrb[0].mxu0 %v1305
        %v1531 = vpop.f32.mrb[0].mxu0
        %v1532 = vadd.f32 %v1327, %v1531
        %v1533 = vpop.f32.mrb[0].mxu0
        %v1534 = vpop.f32.mrb[0].mxu0
        %v1535 = vadd.f32 %v1327, %v1534
        %v1536 = vpop.f32.mrb[0].mxu0
        %1537 = vdwg.mxu0
        %v1538 = vtanh.pop %v1412
        %v1539 = vtanh.pop %v1415
        %v1540 = vtanh.pop %v1420
        %v1541 = vtanh.pop %v1423
        %v1542 = vtanh.pop %v1428
        %v1543 = vtanh.pop %v1431
        %v1544 = vtanh.pop %v1436
        %v1545 = vtanh.pop %v1439
        %v1546 = vtanh.pop %v1444
        %v1547 = vtanh.pop %v1447
        %v1548 = vtanh.pop %v1452
        %v1549 = vtanh.pop %v1455
        %v1550 = vtanh.pop %v1460
        %v1551 = vtanh.pop %v1463
        %v1552 = vtanh.pop %v1468
        %v1553 = vtanh.pop %v1471
        %v1554 = vtanh.pop %v1476
        %v1555 = vtanh.pop %v1479
        %v1556 = vtanh.pop %v1484
        %v1557 = vtanh.pop %v1487
        %v1558 = vtanh.pop %v1492
        %v1559 = vtanh.pop %v1495
        %v1560 = vtanh.pop %v1500
        %v1561 = vtanh.pop %v1503
        %v1562 = vtanh.pop %v1508
        %v1563 = vtanh.pop %v1511
        %v1564 = vtanh.pop %v1516
        %v1565 = vtanh.pop %v1519
        %v1566 = vtanh.pop %v1524
        %v1567 = vtanh.pop %v1527
        %v1568 = vtanh.pop %v1532
        %v1569 = vtanh.pop %v1535
        %v1570 = vpack.c.bf16 %v1539, %v1538
        %v1571 = vpack.c.bf16 %v1541, %v1540
        %v1572 = vpack.c.bf16 %v1543, %v1542
        %v1573 = vpack.c.bf16 %v1545, %v1544
        %v1574 = vpack.c.bf16 %v1547, %v1546
        %v1575 = vpack.c.bf16 %v1549, %v1548
        %v1576 = vpack.c.bf16 %v1551, %v1550
        %v1577 = vpack.c.bf16 %v1553, %v1552
        %v1578 = vpack.c.bf16 %v1555, %v1554
        %v1579 = vpack.c.bf16 %v1557, %v1556
        %v1580 = vpack.c.bf16 %v1559, %v1558
        %v1581 = vpack.c.bf16 %v1561, %v1560
        %v1582 = vpack.c.bf16 %v1563, %v1562
        %v1583 = vpack.c.bf16 %v1565, %v1564
        %v1584 = vpack.c.bf16 %v1567, %v1566
        %v1585 = vpack.c.bf16 %v1569, %v1568
        %v1586 = vld [vmem:[#allocation10] sm:$0xf]
        %v1587 = vld [vmem:[#allocation10 + $0x4] sm:$0xf]
        %v1588 = vld [vmem:[#allocation10 + $0x8] sm:$0xf]
        %v1589 = vld [vmem:[#allocation10 + $0xc] sm:$0xf]
        %v1590 = vld [vmem:[#allocation10 + $0x10] sm:$0xf]
        %v1591 = vld [vmem:[#allocation10 + $0x14] sm:$0xf]
        %v1592 = vld [vmem:[#allocation10 + $0x18] sm:$0xf]
        %v1593 = vld [vmem:[#allocation10 + $0x1c] sm:$0xf]
        %v1594 = vld [vmem:[#allocation10 + $0x20] sm:$0xf]
        %v1595 = vld [vmem:[#allocation10 + $0x24] sm:$0xf]
        %v1596 = vld [vmem:[#allocation10 + $0x28] sm:$0xf]
        %v1597 = vld [vmem:[#allocation10 + $0x2c] sm:$0xf]
        %v1598 = vld [vmem:[#allocation10 + $0x30] sm:$0xf]
        %v1599 = vld [vmem:[#allocation10 + $0x34] sm:$0xf]
        %v1600 = vld [vmem:[#allocation10 + $0x38] sm:$0xf]
        %v1601 = vld [vmem:[#allocation10 + $0x3c] sm:$0xf]
        %v1602 = vld [vmem:[%s8] sm:$0x1]
        %v1604 = vlaneseq
        %v1605 = vshrl.u32 %v1604, 7
        %v1606 = vsub.s32 0, %v1605
        %v1607 = vrot.slane %v1602, %v1606
        %v1625 = vunpack.c.l.b16 %v1586
        %v1626 = vunpack.c.l.b16 %v1587
        %v1627 = vunpack.c.l.b16 %v1588
        %v1628 = vunpack.c.l.b16 %v1589
        %v1629 = vunpack.c.l.b16 %v1590
        %v1630 = vunpack.c.l.b16 %v1591
        %v1631 = vunpack.c.l.b16 %v1592
        %v1632 = vunpack.c.l.b16 %v1593
        %v1633 = vunpack.c.l.b16 %v1594
        %v1634 = vunpack.c.l.b16 %v1595
        %v1635 = vunpack.c.l.b16 %v1596
        %v1636 = vunpack.c.l.b16 %v1597
        %v1637 = vunpack.c.l.b16 %v1598
        %v1638 = vunpack.c.l.b16 %v1599
        %v1639 = vunpack.c.l.b16 %v1600
        %v1640 = vunpack.c.l.b16 %v1601
        %v1641 = vpack.c.b16 %v1626, %v1625
        %v1642 = vpack.c.b16 %v1628, %v1627
        %v1643 = vpack.c.b16 %v1630, %v1629
        %v1644 = vpack.c.b16 %v1632, %v1631
        %v1645 = vpack.c.b16 %v1634, %v1633
        %v1646 = vpack.c.b16 %v1636, %v1635
        %v1647 = vpack.c.b16 %v1638, %v1637
        %v1648 = vpack.c.b16 %v1640, %v1639
        %1657 = vmatprep.subr.bf16.mxu0 0
        %1658 = vmatpush1.bf16.msra.mxu0 %v1641
        %1659 = vmatprep.subr.bf16.mxu0 0
        %1660 = vmatpush1.bf16.msra.mxu0 %v1642
        %1661 = vmatprep.subr.bf16.mxu0 0
        %1662 = vmatpush1.bf16.msra.mxu0 %v1643
        %1663 = vmatprep.subr.bf16.mxu0 0
        %1664 = vmatpush1.bf16.msra.mxu0 %v1644
        %1665 = vmatprep.subr.bf16.mxu0 0
        %1666 = vmatpush1.bf16.msra.mxu0 %v1645
        %1667 = vmatprep.subr.bf16.mxu0 0
        %1668 = vmatpush1.bf16.msra.mxu0 %v1646
        %1669 = vmatprep.subr.bf16.mxu0 0
        %1670 = vmatpush1.bf16.msra.mxu0 %v1647
        %1671 = vmatprep.subr.bf16.mxu0 0
        %1672 = vmatpush1.bf16.msra.mxu0 %v1648
        %1673 = vmatprep.subr.bf16.mxu0 0
        %1674 = vmatpush1.bf16.msra.mxu0 0
        %1675 = vmatprep.subr.bf16.mxu0 0
        %1676 = vmatpush1.bf16.msra.mxu0 0
        %1677 = vmatprep.subr.bf16.mxu0 0
        %1678 = vmatpush1.bf16.msra.mxu0 0
        %1679 = vmatprep.subr.bf16.mxu0 0
        %1680 = vmatpush1.bf16.msra.mxu0 0
        %1681 = vmatprep.subr.bf16.mxu0 0
        %1682 = vmatpush1.bf16.msra.mxu0 0
        %1683 = vmatprep.subr.bf16.mxu0 0
        %1684 = vmatpush1.bf16.msra.mxu0 0
        %1685 = vmatprep.subr.bf16.mxu0 0
        %1686 = vmatpush1.bf16.msra.mxu0 0
        %1687 = vmatprep.subr.bf16.mxu0 0
        %1688 = vmatpush1.bf16.msra.mxu0 0
        %1689 = vmatprep.mubr.bf16.mxu0 0
        %1690 = vmatmul.mubr.bf16.gmra.mrb[0].mxu0 %v1570
        %v1691 = vpop.f32.mrb[0].mxu0
        %v1692 = vadd.f32 %v1607, %v1691
        %v1693 = vpop.f32.mrb[0].mxu0
        %v1694 = vpop.f32.mrb[0].mxu0
        %v1695 = vadd.f32 %v1607, %v1694
        %v1696 = vpop.f32.mrb[0].mxu0
        %1697 = vmatprep.mubr.bf16.mxu0 0
        %1698 = vmatmul.mubr.bf16.gmra.mrb[0].mxu0 %v1571
        %v1699 = vpop.f32.mrb[0].mxu0
        %v1700 = vadd.f32 %v1607, %v1699
        %v1701 = vpop.f32.mrb[0].mxu0
        %v1702 = vpop.f32.mrb[0].mxu0
        %v1703 = vadd.f32 %v1607, %v1702
        %v1704 = vpop.f32.mrb[0].mxu0
        %1705 = vmatprep.mubr.bf16.mxu0 0
        %1706 = vmatmul.mubr.bf16.gmra.mrb[0].mxu0 %v1572
        %v1707 = vpop.f32.mrb[0].mxu0
        %v1708 = vadd.f32 %v1607, %v1707
        %v1709 = vpop.f32.mrb[0].mxu0
        %v1710 = vpop.f32.mrb[0].mxu0
        %v1711 = vadd.f32 %v1607, %v1710
        %v1712 = vpop.f32.mrb[0].mxu0
        %1713 = vmatprep.mubr.bf16.mxu0 0
        %1714 = vmatmul.mubr.bf16.gmra.mrb[0].mxu0 %v1573
        %v1715 = vpop.f32.mrb[0].mxu0
        %v1716 = vadd.f32 %v1607, %v1715
        %v1717 = vpop.f32.mrb[0].mxu0
        %v1718 = vpop.f32.mrb[0].mxu0
        %v1719 = vadd.f32 %v1607, %v1718
        %v1720 = vpop.f32.mrb[0].mxu0
        %1721 = vmatprep.mubr.bf16.mxu0 0
        %1722 = vmatmul.mubr.bf16.gmra.mrb[0].mxu0 %v1574
        %v1723 = vpop.f32.mrb[0].mxu0
        %v1724 = vadd.f32 %v1607, %v1723
        %v1725 = vpop.f32.mrb[0].mxu0
        %v1726 = vpop.f32.mrb[0].mxu0
        %v1727 = vadd.f32 %v1607, %v1726
        %v1728 = vpop.f32.mrb[0].mxu0
        %1729 = vmatprep.mubr.bf16.mxu0 0
        %1730 = vmatmul.mubr.bf16.gmra.mrb[0].mxu0 %v1575
        %v1731 = vpop.f32.mrb[0].mxu0
        %v1732 = vadd.f32 %v1607, %v1731
        %v1733 = vpop.f32.mrb[0].mxu0
        %v1734 = vpop.f32.mrb[0].mxu0
        %v1735 = vadd.f32 %v1607, %v1734
        %v1736 = vpop.f32.mrb[0].mxu0
        %1737 = vmatprep.mubr.bf16.mxu0 0
        %1738 = vmatmul.mubr.bf16.gmra.mrb[0].mxu0 %v1576
        %v1739 = vpop.f32.mrb[0].mxu0
        %v1740 = vadd.f32 %v1607, %v1739
        %v1741 = vpop.f32.mrb[0].mxu0
        %v1742 = vpop.f32.mrb[0].mxu0
        %v1743 = vadd.f32 %v1607, %v1742
        %v1744 = vpop.f32.mrb[0].mxu0
        %1745 = vmatprep.mubr.bf16.mxu0 0
        %1746 = vmatmul.mubr.bf16.gmra.mrb[0].mxu0 %v1577
        %v1747 = vpop.f32.mrb[0].mxu0
        %v1748 = vadd.f32 %v1607, %v1747
        %v1749 = vpop.f32.mrb[0].mxu0
        %v1750 = vpop.f32.mrb[0].mxu0
        %v1751 = vadd.f32 %v1607, %v1750
        %v1752 = vpop.f32.mrb[0].mxu0
        %1753 = vmatprep.mubr.bf16.mxu0 0
        %1754 = vmatmul.mubr.bf16.gmra.mrb[0].mxu0 %v1578
        %v1755 = vpop.f32.mrb[0].mxu0
        %v1756 = vadd.f32 %v1607, %v1755
        %v1757 = vpop.f32.mrb[0].mxu0
        %v1758 = vpop.f32.mrb[0].mxu0
        %v1759 = vadd.f32 %v1607, %v1758
        %v1760 = vpop.f32.mrb[0].mxu0
        %1761 = vmatprep.mubr.bf16.mxu0 0
        %1762 = vmatmul.mubr.bf16.gmra.mrb[0].mxu0 %v1579
        %v1763 = vpop.f32.mrb[0].mxu0
        %v1764 = vadd.f32 %v1607, %v1763
        %v1765 = vpop.f32.mrb[0].mxu0
        %v1766 = vpop.f32.mrb[0].mxu0
        %v1767 = vadd.f32 %v1607, %v1766
        %v1768 = vpop.f32.mrb[0].mxu0
        %1769 = vmatprep.mubr.bf16.mxu0 0
        %1770 = vmatmul.mubr.bf16.gmra.mrb[0].mxu0 %v1580
        %v1771 = vpop.f32.mrb[0].mxu0
        %v1772 = vadd.f32 %v1607, %v1771
        %v1773 = vpop.f32.mrb[0].mxu0
        %v1774 = vpop.f32.mrb[0].mxu0
        %v1775 = vadd.f32 %v1607, %v1774
        %v1776 = vpop.f32.mrb[0].mxu0
        %1777 = vmatprep.mubr.bf16.mxu0 0
        %1778 = vmatmul.mubr.bf16.gmra.mrb[0].mxu0 %v1581
        %v1779 = vpop.f32.mrb[0].mxu0
        %v1780 = vadd.f32 %v1607, %v1779
        %v1781 = vpop.f32.mrb[0].mxu0
        %v1782 = vpop.f32.mrb[0].mxu0
        %v1783 = vadd.f32 %v1607, %v1782
        %v1784 = vpop.f32.mrb[0].mxu0
        %1785 = vmatprep.mubr.bf16.mxu0 0
        %1786 = vmatmul.mubr.bf16.gmra.mrb[0].mxu0 %v1582
        %v1787 = vpop.f32.mrb[0].mxu0
        %v1788 = vadd.f32 %v1607, %v1787
        %v1789 = vpop.f32.mrb[0].mxu0
        %v1790 = vpop.f32.mrb[0].mxu0
        %v1791 = vadd.f32 %v1607, %v1790
        %v1792 = vpop.f32.mrb[0].mxu0
        %1793 = vmatprep.mubr.bf16.mxu0 0
        %1794 = vmatmul.mubr.bf16.gmra.mrb[0].mxu0 %v1583
        %v1795 = vpop.f32.mrb[0].mxu0
        %v1796 = vadd.f32 %v1607, %v1795
        %v1797 = vpop.f32.mrb[0].mxu0
        %v1798 = vpop.f32.mrb[0].mxu0
        %v1799 = vadd.f32 %v1607, %v1798
        %v1800 = vpop.f32.mrb[0].mxu0
        %1801 = vmatprep.mubr.bf16.mxu0 0
        %1802 = vmatmul.mubr.bf16.gmra.mrb[0].mxu0 %v1584
        %v1803 = vpop.f32.mrb[0].mxu0
        %v1804 = vadd.f32 %v1607, %v1803
        %v1805 = vpop.f32.mrb[0].mxu0
        %v1806 = vpop.f32.mrb[0].mxu0
        %v1807 = vadd.f32 %v1607, %v1806
        %v1808 = vpop.f32.mrb[0].mxu0
        %1809 = vmatprep.mubr.bf16.mxu0 0
        %1810 = vmatmul.mubr.bf16.gmra.mrb[0].mxu0 %v1585
        %v1811 = vpop.f32.mrb[0].mxu0
        %v1812 = vadd.f32 %v1607, %v1811
        %v1813 = vpop.f32.mrb[0].mxu0
        %v1814 = vpop.f32.mrb[0].mxu0
        %v1815 = vadd.f32 %v1607, %v1814
        %v1816 = vpop.f32.mrb[0].mxu0
        %1817 = vdwg.mxu0
        %v1818 = vtanh.pop %v1692
        %v1819 = vtanh.pop %v1695
        %v1820 = vtanh.pop %v1700
        %v1821 = vtanh.pop %v1703
        %v1822 = vtanh.pop %v1708
        %v1823 = vtanh.pop %v1711
        %v1824 = vtanh.pop %v1716
        %v1825 = vtanh.pop %v1719
        %v1826 = vtanh.pop %v1724
        %v1827 = vtanh.pop %v1727
        %v1828 = vtanh.pop %v1732
        %v1829 = vtanh.pop %v1735
        %v1830 = vtanh.pop %v1740
        %v1831 = vtanh.pop %v1743
        %v1832 = vtanh.pop %v1748
        %v1833 = vtanh.pop %v1751
        %v1834 = vtanh.pop %v1756
        %v1835 = vtanh.pop %v1759
        %v1836 = vtanh.pop %v1764
        %v1837 = vtanh.pop %v1767
        %v1838 = vtanh.pop %v1772
        %v1839 = vtanh.pop %v1775
        %v1840 = vtanh.pop %v1780
        %v1841 = vtanh.pop %v1783
        %v1842 = vtanh.pop %v1788
        %v1843 = vtanh.pop %v1791
        %v1844 = vtanh.pop %v1796
        %v1845 = vtanh.pop %v1799
        %v1846 = vtanh.pop %v1804
        %v1847 = vtanh.pop %v1807
        %v1848 = vtanh.pop %v1812
        %v1849 = vtanh.pop %v1815
        %v1850 = vpack.c.bf16 %v1819, %v1818
        %v1851 = vpack.c.bf16 %v1821, %v1820
        %v1852 = vpack.c.bf16 %v1823, %v1822
        %v1853 = vpack.c.bf16 %v1825, %v1824
        %v1854 = vpack.c.bf16 %v1827, %v1826
        %v1855 = vpack.c.bf16 %v1829, %v1828
        %v1856 = vpack.c.bf16 %v1831, %v1830
        %v1857 = vpack.c.bf16 %v1833, %v1832
        %v1858 = vpack.c.bf16 %v1835, %v1834
        %v1859 = vpack.c.bf16 %v1837, %v1836
        %v1860 = vpack.c.bf16 %v1839, %v1838
        %v1861 = vpack.c.bf16 %v1841, %v1840
        %v1862 = vpack.c.bf16 %v1843, %v1842
        %v1863 = vpack.c.bf16 %v1845, %v1844
        %v1864 = vpack.c.bf16 %v1847, %v1846
        %v1865 = vpack.c.bf16 %v1849, %v1848
        %v1866 = vld [vmem:[#allocation11] sm:$0xf]
        %v1867 = vld [vmem:[#allocation11 + $0x4] sm:$0xf]
        %v1868 = vld [vmem:[#allocation11 + $0x8] sm:$0xf]
        %v1869 = vld [vmem:[#allocation11 + $0xc] sm:$0xf]
        %v1870 = vld [vmem:[#allocation11 + $0x10] sm:$0xf]
        %v1871 = vld [vmem:[#allocation11 + $0x14] sm:$0xf]
        %v1872 = vld [vmem:[#allocation11 + $0x18] sm:$0xf]
        %v1873 = vld [vmem:[#allocation11 + $0x1c] sm:$0xf]
        %v1874 = vld [vmem:[#allocation11 + $0x20] sm:$0xf]
        %v1875 = vld [vmem:[#allocation11 + $0x24] sm:$0xf]
        %v1876 = vld [vmem:[#allocation11 + $0x28] sm:$0xf]
        %v1877 = vld [vmem:[#allocation11 + $0x2c] sm:$0xf]
        %v1878 = vld [vmem:[#allocation11 + $0x30] sm:$0xf]
        %v1879 = vld [vmem:[#allocation11 + $0x34] sm:$0xf]
        %v1880 = vld [vmem:[#allocation11 + $0x38] sm:$0xf]
        %v1881 = vld [vmem:[#allocation11 + $0x3c] sm:$0xf]
        %v1882 = vld [vmem:[%s10] sm:$0x1]
        %v1884 = vlaneseq
        %v1885 = vshrl.u32 %v1884, 7
        %v1886 = vsub.s32 0, %v1885
        %v1887 = vrot.slane %v1882, %v1886
        %v1905 = vunpack.c.l.b16 %v1866
        %v1906 = vunpack.c.l.b16 %v1867
        %v1907 = vunpack.c.l.b16 %v1868
        %v1908 = vunpack.c.l.b16 %v1869
        %v1909 = vunpack.c.l.b16 %v1870
        %v1910 = vunpack.c.l.b16 %v1871
        %v1911 = vunpack.c.l.b16 %v1872
        %v1912 = vunpack.c.l.b16 %v1873
        %v1913 = vunpack.c.l.b16 %v1874
        %v1914 = vunpack.c.l.b16 %v1875
        %v1915 = vunpack.c.l.b16 %v1876
        %v1916 = vunpack.c.l.b16 %v1877
        %v1917 = vunpack.c.l.b16 %v1878
        %v1918 = vunpack.c.l.b16 %v1879
        %v1919 = vunpack.c.l.b16 %v1880
        %v1920 = vunpack.c.l.b16 %v1881
        %v1921 = vpack.c.b16 %v1906, %v1905
        %v1922 = vpack.c.b16 %v1908, %v1907
        %v1923 = vpack.c.b16 %v1910, %v1909
        %v1924 = vpack.c.b16 %v1912, %v1911
        %v1925 = vpack.c.b16 %v1914, %v1913
        %v1926 = vpack.c.b16 %v1916, %v1915
        %v1927 = vpack.c.b16 %v1918, %v1917
        %v1928 = vpack.c.b16 %v1920, %v1919
        %1937 = vmatprep.subr.bf16.mxu0 0
        %1938 = vmatpush1.bf16.msra.mxu0 %v1921
        %1939 = vmatprep.subr.bf16.mxu0 0
        %1940 = vmatpush1.bf16.msra.mxu0 %v1922
        %1941 = vmatprep.subr.bf16.mxu0 0
        %1942 = vmatpush1.bf16.msra.mxu0 %v1923
        %1943 = vmatprep.subr.bf16.mxu0 0
        %1944 = vmatpush1.bf16.msra.mxu0 %v1924
        %1945 = vmatprep.subr.bf16.mxu0 0
        %1946 = vmatpush1.bf16.msra.mxu0 %v1925
        %1947 = vmatprep.subr.bf16.mxu0 0
        %1948 = vmatpush1.bf16.msra.mxu0 %v1926
        %1949 = vmatprep.subr.bf16.mxu0 0
        %1950 = vmatpush1.bf16.msra.mxu0 %v1927
        %1951 = vmatprep.subr.bf16.mxu0 0
        %1952 = vmatpush1.bf16.msra.mxu0 %v1928
        %1953 = vmatprep.subr.bf16.mxu0 0
        %1954 = vmatpush1.bf16.msra.mxu0 0
        %1955 = vmatprep.subr.bf16.mxu0 0
        %1956 = vmatpush1.bf16.msra.mxu0 0
        %1957 = vmatprep.subr.bf16.mxu0 0
        %1958 = vmatpush1.bf16.msra.mxu0 0
        %1959 = vmatprep.subr.bf16.mxu0 0
        %1960 = vmatpush1.bf16.msra.mxu0 0
        %1961 = vmatprep.subr.bf16.mxu0 0
        %1962 = vmatpush1.bf16.msra.mxu0 0
        %1963 = vmatprep.subr.bf16.mxu0 0
        %1964 = vmatpush1.bf16.msra.mxu0 0
        %1965 = vmatprep.subr.bf16.mxu0 0
        %1966 = vmatpush1.bf16.msra.mxu0 0
        %1967 = vmatprep.subr.bf16.mxu0 0
        %1968 = vmatpush1.bf16.msra.mxu0 0
        %1969 = vmatprep.mubr.bf16.mxu0 0
        %1970 = vmatmul.mubr.bf16.gmra.mrb[0].mxu0 %v1850
        %v1971 = vpop.f32.mrb[0].mxu0
        %v1972 = vadd.f32 %v1887, %v1971
        %v1973 = vpop.f32.mrb[0].mxu0
        %v1974 = vpop.f32.mrb[0].mxu0
        %v1975 = vadd.f32 %v1887, %v1974
        %v1976 = vpop.f32.mrb[0].mxu0
        %1977 = vmatprep.mubr.bf16.mxu0 0
        %1978 = vmatmul.mubr.bf16.gmra.mrb[0].mxu0 %v1851
        %v1979 = vpop.f32.mrb[0].mxu0
        %v1980 = vadd.f32 %v1887, %v1979
        %v1981 = vpop.f32.mrb[0].mxu0
        %v1982 = vpop.f32.mrb[0].mxu0
        %v1983 = vadd.f32 %v1887, %v1982
        %v1984 = vpop.f32.mrb[0].mxu0
        %1985 = vmatprep.mubr.bf16.mxu0 0
        %1986 = vmatmul.mubr.bf16.gmra.mrb[0].mxu0 %v1852
        %v1987 = vpop.f32.mrb[0].mxu0
        %v1988 = vadd.f32 %v1887, %v1987
        %v1989 = vpop.f32.mrb[0].mxu0
        %v1990 = vpop.f32.mrb[0].mxu0
        %v1991 = vadd.f32 %v1887, %v1990
        %v1992 = vpop.f32.mrb[0].mxu0
        %1993 = vmatprep.mubr.bf16.mxu0 0
        %1994 = vmatmul.mubr.bf16.gmra.mrb[0].mxu0 %v1853
        %v1995 = vpop.f32.mrb[0].mxu0
        %v1996 = vadd.f32 %v1887, %v1995
        %v1997 = vpop.f32.mrb[0].mxu0
        %v1998 = vpop.f32.mrb[0].mxu0
        %v1999 = vadd.f32 %v1887, %v1998
        %v2000 = vpop.f32.mrb[0].mxu0
        %2001 = vmatprep.mubr.bf16.mxu0 0
        %2002 = vmatmul.mubr.bf16.gmra.mrb[0].mxu0 %v1854
        %v2003 = vpop.f32.mrb[0].mxu0
        %v2004 = vadd.f32 %v1887, %v2003
        %v2005 = vpop.f32.mrb[0].mxu0
        %v2006 = vpop.f32.mrb[0].mxu0
        %v2007 = vadd.f32 %v1887, %v2006
        %v2008 = vpop.f32.mrb[0].mxu0
        %2009 = vmatprep.mubr.bf16.mxu0 0
        %2010 = vmatmul.mubr.bf16.gmra.mrb[0].mxu0 %v1855
        %v2011 = vpop.f32.mrb[0].mxu0
        %v2012 = vadd.f32 %v1887, %v2011
        %v2013 = vpop.f32.mrb[0].mxu0
        %v2014 = vpop.f32.mrb[0].mxu0
        %v2015 = vadd.f32 %v1887, %v2014
        %v2016 = vpop.f32.mrb[0].mxu0
        %2017 = vmatprep.mubr.bf16.mxu0 0
        %2018 = vmatmul.mubr.bf16.gmra.mrb[0].mxu0 %v1856
        %v2019 = vpop.f32.mrb[0].mxu0
        %v2020 = vadd.f32 %v1887, %v2019
        %v2021 = vpop.f32.mrb[0].mxu0
        %v2022 = vpop.f32.mrb[0].mxu0
        %v2023 = vadd.f32 %v1887, %v2022
        %v2024 = vpop.f32.mrb[0].mxu0
        %2025 = vmatprep.mubr.bf16.mxu0 0
        %2026 = vmatmul.mubr.bf16.gmra.mrb[0].mxu0 %v1857
        %v2027 = vpop.f32.mrb[0].mxu0
        %v2028 = vadd.f32 %v1887, %v2027
        %v2029 = vpop.f32.mrb[0].mxu0
        %v2030 = vpop.f32.mrb[0].mxu0
        %v2031 = vadd.f32 %v1887, %v2030
        %v2032 = vpop.f32.mrb[0].mxu0
        %2033 = vmatprep.mubr.bf16.mxu0 0
        %2034 = vmatmul.mubr.bf16.gmra.mrb[0].mxu0 %v1858
        %v2035 = vpop.f32.mrb[0].mxu0
        %v2036 = vadd.f32 %v1887, %v2035
        %v2037 = vpop.f32.mrb[0].mxu0
        %v2038 = vpop.f32.mrb[0].mxu0
        %v2039 = vadd.f32 %v1887, %v2038
        %v2040 = vpop.f32.mrb[0].mxu0
        %2041 = vmatprep.mubr.bf16.mxu0 0
        %2042 = vmatmul.mubr.bf16.gmra.mrb[0].mxu0 %v1859
        %v2043 = vpop.f32.mrb[0].mxu0
        %v2044 = vadd.f32 %v1887, %v2043
        %v2045 = vpop.f32.mrb[0].mxu0
        %v2046 = vpop.f32.mrb[0].mxu0
        %v2047 = vadd.f32 %v1887, %v2046
        %v2048 = vpop.f32.mrb[0].mxu0
        %2049 = vmatprep.mubr.bf16.mxu0 0
        %2050 = vmatmul.mubr.bf16.gmra.mrb[0].mxu0 %v1860
        %v2051 = vpop.f32.mrb[0].mxu0
        %v2052 = vadd.f32 %v1887, %v2051
        %v2053 = vpop.f32.mrb[0].mxu0
        %v2054 = vpop.f32.mrb[0].mxu0
        %v2055 = vadd.f32 %v1887, %v2054
        %v2056 = vpop.f32.mrb[0].mxu0
        %2057 = vmatprep.mubr.bf16.mxu0 0
        %2058 = vmatmul.mubr.bf16.gmra.mrb[0].mxu0 %v1861
        %v2059 = vpop.f32.mrb[0].mxu0
        %v2060 = vadd.f32 %v1887, %v2059
        %v2061 = vpop.f32.mrb[0].mxu0
        %v2062 = vpop.f32.mrb[0].mxu0
        %v2063 = vadd.f32 %v1887, %v2062
        %v2064 = vpop.f32.mrb[0].mxu0
        %2065 = vmatprep.mubr.bf16.mxu0 0
        %2066 = vmatmul.mubr.bf16.gmra.mrb[0].mxu0 %v1862
        %v2067 = vpop.f32.mrb[0].mxu0
        %v2068 = vadd.f32 %v1887, %v2067
        %v2069 = vpop.f32.mrb[0].mxu0
        %v2070 = vpop.f32.mrb[0].mxu0
        %v2071 = vadd.f32 %v1887, %v2070
        %v2072 = vpop.f32.mrb[0].mxu0
        %2073 = vmatprep.mubr.bf16.mxu0 0
        %2074 = vmatmul.mubr.bf16.gmra.mrb[0].mxu0 %v1863
        %v2075 = vpop.f32.mrb[0].mxu0
        %v2076 = vadd.f32 %v1887, %v2075
        %v2077 = vpop.f32.mrb[0].mxu0
        %v2078 = vpop.f32.mrb[0].mxu0
        %v2079 = vadd.f32 %v1887, %v2078
        %v2080 = vpop.f32.mrb[0].mxu0
        %2081 = vmatprep.mubr.bf16.mxu0 0
        %2082 = vmatmul.mubr.bf16.gmra.mrb[0].mxu0 %v1864
        %v2083 = vpop.f32.mrb[0].mxu0
        %v2084 = vadd.f32 %v1887, %v2083
        %v2085 = vpop.f32.mrb[0].mxu0
        %v2086 = vpop.f32.mrb[0].mxu0
        %v2087 = vadd.f32 %v1887, %v2086
        %v2088 = vpop.f32.mrb[0].mxu0
        %2089 = vmatprep.mubr.bf16.mxu0 0
        %2090 = vmatmul.mubr.bf16.gmra.mrb[0].mxu0 %v1865
        %v2091 = vpop.f32.mrb[0].mxu0
        %v2092 = vadd.f32 %v1887, %v2091
        %v2093 = vpop.f32.mrb[0].mxu0
        %v2094 = vpop.f32.mrb[0].mxu0
        %v2095 = vadd.f32 %v1887, %v2094
        %v2096 = vpop.f32.mrb[0].mxu0
        %2097 = vdwg.mxu0
        %v2098 = vtanh.pop %v1972
        %v2099 = vtanh.pop %v1975
        %v2100 = vtanh.pop %v1980
        %v2101 = vtanh.pop %v1983
        %v2102 = vtanh.pop %v1988
        %v2103 = vtanh.pop %v1991
        %v2104 = vtanh.pop %v1996
        %v2105 = vtanh.pop %v1999
        %v2106 = vtanh.pop %v2004
        %v2107 = vtanh.pop %v2007
        %v2108 = vtanh.pop %v2012
        %v2109 = vtanh.pop %v2015
        %v2110 = vtanh.pop %v2020
        %v2111 = vtanh.pop %v2023
        %v2112 = vtanh.pop %v2028
        %v2113 = vtanh.pop %v2031
        %v2114 = vtanh.pop %v2036
        %v2115 = vtanh.pop %v2039
        %v2116 = vtanh.pop %v2044
        %v2117 = vtanh.pop %v2047
        %v2118 = vtanh.pop %v2052
        %v2119 = vtanh.pop %v2055
        %v2120 = vtanh.pop %v2060
        %v2121 = vtanh.pop %v2063
        %v2122 = vtanh.pop %v2068
        %v2123 = vtanh.pop %v2071
        %v2124 = vtanh.pop %v2076
        %v2125 = vtanh.pop %v2079
        %v2126 = vtanh.pop %v2084
        %v2127 = vtanh.pop %v2087
        %v2128 = vtanh.pop %v2092
        %v2129 = vtanh.pop %v2095
        %v2130 = vadd.f32 %v2098, %v1258
        %v2131 = vadd.f32 %v2099, %v1259
        %v2132 = vadd.f32 %v2100, %v1260
        %v2133 = vadd.f32 %v2101, %v1261
        %v2134 = vadd.f32 %v2102, %v1262
        %v2135 = vadd.f32 %v2103, %v1263
        %v2136 = vadd.f32 %v2104, %v1264
        %v2137 = vadd.f32 %v2105, %v1265
        %v2138 = vadd.f32 %v2106, %v1266
        %v2139 = vadd.f32 %v2107, %v1267
        %v2140 = vadd.f32 %v2108, %v1268
        %v2141 = vadd.f32 %v2109, %v1269
        %v2142 = vadd.f32 %v2110, %v1270
        %v2143 = vadd.f32 %v2111, %v1271
        %v2144 = vadd.f32 %v2112, %v1272
        %v2145 = vadd.f32 %v2113, %v1273
        %v2146 = vadd.f32 %v2114, %v1274
        %v2147 = vadd.f32 %v2115, %v1275
        %v2148 = vadd.f32 %v2116, %v1276
        %v2149 = vadd.f32 %v2117, %v1277
        %v2150 = vadd.f32 %v2118, %v1278
        %v2151 = vadd.f32 %v2119, %v1279
        %v2152 = vadd.f32 %v2120, %v1280
        %v2153 = vadd.f32 %v2121, %v1281
        %v2154 = vadd.f32 %v2122, %v1282
        %v2155 = vadd.f32 %v2123, %v1283
        %v2156 = vadd.f32 %v2124, %v1284
        %v2157 = vadd.f32 %v2125, %v1285
        %v2158 = vadd.f32 %v2126, %v1286
        %v2159 = vadd.f32 %v2127, %v1287
        %v2160 = vadd.f32 %v2128, %v1288
        %v2161 = vadd.f32 %v2129, %v1289
        %v2162 = vpack.c.bf16 %v2131, %v2130
        %v2163 = vpack.c.bf16 %v2133, %v2132
        %v2164 = vpack.c.bf16 %v2135, %v2134
        %v2165 = vpack.c.bf16 %v2137, %v2136
        %v2166 = vpack.c.bf16 %v2139, %v2138
        %v2167 = vpack.c.bf16 %v2141, %v2140
        %v2168 = vpack.c.bf16 %v2143, %v2142
        %v2169 = vpack.c.bf16 %v2145, %v2144
        %v2170 = vpack.c.bf16 %v2147, %v2146
        %v2171 = vpack.c.bf16 %v2149, %v2148
        %v2172 = vpack.c.bf16 %v2151, %v2150
        %v2173 = vpack.c.bf16 %v2153, %v2152
        %v2174 = vpack.c.bf16 %v2155, %v2154
        %v2175 = vpack.c.bf16 %v2157, %v2156
        %v2176 = vpack.c.bf16 %v2159, %v2158
        %v2177 = vpack.c.bf16 %v2161, %v2160
        %v2178 = vld [vmem:[#allocation13] sm:$0xf]
        %v2179 = vld [vmem:[#allocation13 + $0x4] sm:$0xf]
        %v2180 = vld [vmem:[#allocation13 + $0x8] sm:$0xf]
        %v2181 = vld [vmem:[#allocation13 + $0xc] sm:$0xf]
        %v2182 = vld [vmem:[#allocation13 + $0x10] sm:$0xf]
        %v2183 = vld [vmem:[#allocation13 + $0x14] sm:$0xf]
        %v2184 = vld [vmem:[#allocation13 + $0x18] sm:$0xf]
        %v2185 = vld [vmem:[#allocation13 + $0x1c] sm:$0xf]
        %v2186 = vld [vmem:[#allocation13 + $0x20] sm:$0xf]
        %v2187 = vld [vmem:[#allocation13 + $0x24] sm:$0xf]
        %v2188 = vld [vmem:[#allocation13 + $0x28] sm:$0xf]
        %v2189 = vld [vmem:[#allocation13 + $0x2c] sm:$0xf]
        %v2190 = vld [vmem:[#allocation13 + $0x30] sm:$0xf]
        %v2191 = vld [vmem:[#allocation13 + $0x34] sm:$0xf]
        %v2192 = vld [vmem:[#allocation13 + $0x38] sm:$0xf]
        %v2193 = vld [vmem:[#allocation13 + $0x3c] sm:$0xf]
        %v2194 = vld [vmem:[%s12] sm:$0x1]
        %v2196 = vlaneseq
        %v2197 = vshrl.u32 %v2196, 7
        %v2198 = vsub.s32 0, %v2197
        %v2199 = vrot.slane %v2194, %v2198
        %v2217 = vunpack.c.l.b16 %v2178
        %v2218 = vunpack.c.l.b16 %v2179
        %v2219 = vunpack.c.l.b16 %v2180
        %v2220 = vunpack.c.l.b16 %v2181
        %v2221 = vunpack.c.l.b16 %v2182
        %v2222 = vunpack.c.l.b16 %v2183
        %v2223 = vunpack.c.l.b16 %v2184
        %v2224 = vunpack.c.l.b16 %v2185
        %v2225 = vunpack.c.l.b16 %v2186
        %v2226 = vunpack.c.l.b16 %v2187
        %v2227 = vunpack.c.l.b16 %v2188
        %v2228 = vunpack.c.l.b16 %v2189
        %v2229 = vunpack.c.l.b16 %v2190
        %v2230 = vunpack.c.l.b16 %v2191
        %v2231 = vunpack.c.l.b16 %v2192
        %v2232 = vunpack.c.l.b16 %v2193
        %v2233 = vpack.c.b16 %v2218, %v2217
        %v2234 = vpack.c.b16 %v2220, %v2219
        %v2235 = vpack.c.b16 %v2222, %v2221
        %v2236 = vpack.c.b16 %v2224, %v2223
        %v2237 = vpack.c.b16 %v2226, %v2225
        %v2238 = vpack.c.b16 %v2228, %v2227
        %v2239 = vpack.c.b16 %v2230, %v2229
        %v2240 = vpack.c.b16 %v2232, %v2231
        %2249 = vmatprep.subr.bf16.mxu0 0
        %2250 = vmatpush1.bf16.msra.mxu0 %v2233
        %2251 = vmatprep.subr.bf16.mxu0 0
        %2252 = vmatpush1.bf16.msra.mxu0 %v2234
        %2253 = vmatprep.subr.bf16.mxu0 0
        %2254 = vmatpush1.bf16.msra.mxu0 %v2235
        %2255 = vmatprep.subr.bf16.mxu0 0
        %2256 = vmatpush1.bf16.msra.mxu0 %v2236
        %2257 = vmatprep.subr.bf16.mxu0 0
        %2258 = vmatpush1.bf16.msra.mxu0 %v2237
        %2259 = vmatprep.subr.bf16.mxu0 0
        %2260 = vmatpush1.bf16.msra.mxu0 %v2238
        %2261 = vmatprep.subr.bf16.mxu0 0
        %2262 = vmatpush1.bf16.msra.mxu0 %v2239
        %2263 = vmatprep.subr.bf16.mxu0 0
        %2264 = vmatpush1.bf16.msra.mxu0 %v2240
        %2265 = vmatprep.subr.bf16.mxu0 0
        %2266 = vmatpush1.bf16.msra.mxu0 0
        %2267 = vmatprep.subr.bf16.mxu0 0
        %2268 = vmatpush1.bf16.msra.mxu0 0
        %2269 = vmatprep.subr.bf16.mxu0 0
        %2270 = vmatpush1.bf16.msra.mxu0 0
        %2271 = vmatprep.subr.bf16.mxu0 0
        %2272 = vmatpush1.bf16.msra.mxu0 0
        %2273 = vmatprep.subr.bf16.mxu0 0
        %2274 = vmatpush1.bf16.msra.mxu0 0
        %2275 = vmatprep.subr.bf16.mxu0 0
        %2276 = vmatpush1.bf16.msra.mxu0 0
        %2277 = vmatprep.subr.bf16.mxu0 0
        %2278 = vmatpush1.bf16.msra.mxu0 0
        %2279 = vmatprep.subr.bf16.mxu0 0
        %2280 = vmatpush1.bf16.msra.mxu0 0
        %2281 = vmatprep.mubr.bf16.mxu0 0
        %2282 = vmatmul.mubr.bf16.gmra.mrb[0].mxu0 %v2162
        %v2283 = vpop.f32.mrb[0].mxu0
        %v2284 = vadd.f32 %v2199, %v2283
        %v2285 = vpop.f32.mrb[0].mxu0
        %v2286 = vpop.f32.mrb[0].mxu0
        %v2287 = vadd.f32 %v2199, %v2286
        %v2288 = vpop.f32.mrb[0].mxu0
        %2289 = vmatprep.mubr.bf16.mxu0 0
        %2290 = vmatmul.mubr.bf16.gmra.mrb[0].mxu0 %v2163
        %v2291 = vpop.f32.mrb[0].mxu0
        %v2292 = vadd.f32 %v2199, %v2291
        %v2293 = vpop.f32.mrb[0].mxu0
        %v2294 = vpop.f32.mrb[0].mxu0
        %v2295 = vadd.f32 %v2199, %v2294
        %v2296 = vpop.f32.mrb[0].mxu0
        %2297 = vmatprep.mubr.bf16.mxu0 0
        %2298 = vmatmul.mubr.bf16.gmra.mrb[0].mxu0 %v2164
        %v2299 = vpop.f32.mrb[0].mxu0
        %v2300 = vadd.f32 %v2199, %v2299
        %v2301 = vpop.f32.mrb[0].mxu0
        %v2302 = vpop.f32.mrb[0].mxu0
        %v2303 = vadd.f32 %v2199, %v2302
        %v2304 = vpop.f32.mrb[0].mxu0
        %2305 = vmatprep.mubr.bf16.mxu0 0
        %2306 = vmatmul.mubr.bf16.gmra.mrb[0].mxu0 %v2165
        %v2307 = vpop.f32.mrb[0].mxu0
        %v2308 = vadd.f32 %v2199, %v2307
        %v2309 = vpop.f32.mrb[0].mxu0
        %v2310 = vpop.f32.mrb[0].mxu0
        %v2311 = vadd.f32 %v2199, %v2310
        %v2312 = vpop.f32.mrb[0].mxu0
        %2313 = vmatprep.mubr.bf16.mxu0 0
        %2314 = vmatmul.mubr.bf16.gmra.mrb[0].mxu0 %v2166
        %v2315 = vpop.f32.mrb[0].mxu0
        %v2316 = vadd.f32 %v2199, %v2315
        %v2317 = vpop.f32.mrb[0].mxu0
        %v2318 = vpop.f32.mrb[0].mxu0
        %v2319 = vadd.f32 %v2199, %v2318
        %v2320 = vpop.f32.mrb[0].mxu0
        %2321 = vmatprep.mubr.bf16.mxu0 0
        %2322 = vmatmul.mubr.bf16.gmra.mrb[0].mxu0 %v2167
        %v2323 = vpop.f32.mrb[0].mxu0
        %v2324 = vadd.f32 %v2199, %v2323
        %v2325 = vpop.f32.mrb[0].mxu0
        %v2326 = vpop.f32.mrb[0].mxu0
        %v2327 = vadd.f32 %v2199, %v2326
        %v2328 = vpop.f32.mrb[0].mxu0
        %2329 = vmatprep.mubr.bf16.mxu0 0
        %2330 = vmatmul.mubr.bf16.gmra.mrb[0].mxu0 %v2168
        %v2331 = vpop.f32.mrb[0].mxu0
        %v2332 = vadd.f32 %v2199, %v2331
        %v2333 = vpop.f32.mrb[0].mxu0
        %v2334 = vpop.f32.mrb[0].mxu0
        %v2335 = vadd.f32 %v2199, %v2334
        %v2336 = vpop.f32.mrb[0].mxu0
        %2337 = vmatprep.mubr.bf16.mxu0 0
        %2338 = vmatmul.mubr.bf16.gmra.mrb[0].mxu0 %v2169
        %v2339 = vpop.f32.mrb[0].mxu0
        %v2340 = vadd.f32 %v2199, %v2339
        %v2341 = vpop.f32.mrb[0].mxu0
        %v2342 = vpop.f32.mrb[0].mxu0
        %v2343 = vadd.f32 %v2199, %v2342
        %v2344 = vpop.f32.mrb[0].mxu0
        %2345 = vmatprep.mubr.bf16.mxu0 0
        %2346 = vmatmul.mubr.bf16.gmra.mrb[0].mxu0 %v2170
        %v2347 = vpop.f32.mrb[0].mxu0
        %v2348 = vadd.f32 %v2199, %v2347
        %v2349 = vpop.f32.mrb[0].mxu0
        %v2350 = vpop.f32.mrb[0].mxu0
        %v2351 = vadd.f32 %v2199, %v2350
        %v2352 = vpop.f32.mrb[0].mxu0
        %2353 = vmatprep.mubr.bf16.mxu0 0
        %2354 = vmatmul.mubr.bf16.gmra.mrb[0].mxu0 %v2171
        %v2355 = vpop.f32.mrb[0].mxu0
        %v2356 = vadd.f32 %v2199, %v2355
        %v2357 = vpop.f32.mrb[0].mxu0
        %v2358 = vpop.f32.mrb[0].mxu0
        %v2359 = vadd.f32 %v2199, %v2358
        %v2360 = vpop.f32.mrb[0].mxu0
        %2361 = vmatprep.mubr.bf16.mxu0 0
        %2362 = vmatmul.mubr.bf16.gmra.mrb[0].mxu0 %v2172
        %v2363 = vpop.f32.mrb[0].mxu0
        %v2364 = vadd.f32 %v2199, %v2363
        %v2365 = vpop.f32.mrb[0].mxu0
        %v2366 = vpop.f32.mrb[0].mxu0
        %v2367 = vadd.f32 %v2199, %v2366
        %v2368 = vpop.f32.mrb[0].mxu0
        %2369 = vmatprep.mubr.bf16.mxu0 0
        %2370 = vmatmul.mubr.bf16.gmra.mrb[0].mxu0 %v2173
        %v2371 = vpop.f32.mrb[0].mxu0
        %v2372 = vadd.f32 %v2199, %v2371
        %v2373 = vpop.f32.mrb[0].mxu0
        %v2374 = vpop.f32.mrb[0].mxu0
        %v2375 = vadd.f32 %v2199, %v2374
        %v2376 = vpop.f32.mrb[0].mxu0
        %2377 = vmatprep.mubr.bf16.mxu0 0
        %2378 = vmatmul.mubr.bf16.gmra.mrb[0].mxu0 %v2174
        %v2379 = vpop.f32.mrb[0].mxu0
        %v2380 = vadd.f32 %v2199, %v2379
        %v2381 = vpop.f32.mrb[0].mxu0
        %v2382 = vpop.f32.mrb[0].mxu0
        %v2383 = vadd.f32 %v2199, %v2382
        %v2384 = vpop.f32.mrb[0].mxu0
        %2385 = vmatprep.mubr.bf16.mxu0 0
        %2386 = vmatmul.mubr.bf16.gmra.mrb[0].mxu0 %v2175
        %v2387 = vpop.f32.mrb[0].mxu0
        %v2388 = vadd.f32 %v2199, %v2387
        %v2389 = vpop.f32.mrb[0].mxu0
        %v2390 = vpop.f32.mrb[0].mxu0
        %v2391 = vadd.f32 %v2199, %v2390
        %v2392 = vpop.f32.mrb[0].mxu0
        %2393 = vmatprep.mubr.bf16.mxu0 0
        %2394 = vmatmul.mubr.bf16.gmra.mrb[0].mxu0 %v2176
        %v2395 = vpop.f32.mrb[0].mxu0
        %v2396 = vadd.f32 %v2199, %v2395
        %v2397 = vpop.f32.mrb[0].mxu0
        %v2398 = vpop.f32.mrb[0].mxu0
        %v2399 = vadd.f32 %v2199, %v2398
        %v2400 = vpop.f32.mrb[0].mxu0
        %2401 = vmatprep.mubr.bf16.mxu0 0
        %2402 = vmatmul.mubr.bf16.gmra.mrb[0].mxu0 %v2177
        %v2403 = vpop.f32.mrb[0].mxu0
        %v2404 = vadd.f32 %v2199, %v2403
        %v2405 = vpop.f32.mrb[0].mxu0
        %v2406 = vpop.f32.mrb[0].mxu0
        %v2407 = vadd.f32 %v2199, %v2406
        %v2408 = vpop.f32.mrb[0].mxu0
        %2409 = vdwg.mxu0
        %v2410 = vtanh.pop %v2284
        %v2411 = vtanh.pop %v2287
        %v2412 = vtanh.pop %v2292
        %v2413 = vtanh.pop %v2295
        %v2414 = vtanh.pop %v2300
        %v2415 = vtanh.pop %v2303
        %v2416 = vtanh.pop %v2308
        %v2417 = vtanh.pop %v2311
        %v2418 = vtanh.pop %v2316
        %v2419 = vtanh.pop %v2319
        %v2420 = vtanh.pop %v2324
        %v2421 = vtanh.pop %v2327
        %v2422 = vtanh.pop %v2332
        %v2423 = vtanh.pop %v2335
        %v2424 = vtanh.pop %v2340
        %v2425 = vtanh.pop %v2343
        %v2426 = vtanh.pop %v2348
        %v2427 = vtanh.pop %v2351
        %v2428 = vtanh.pop %v2356
        %v2429 = vtanh.pop %v2359
        %v2430 = vtanh.pop %v2364
        %v2431 = vtanh.pop %v2367
        %v2432 = vtanh.pop %v2372
        %v2433 = vtanh.pop %v2375
        %v2434 = vtanh.pop %v2380
        %v2435 = vtanh.pop %v2383
        %v2436 = vtanh.pop %v2388
        %v2437 = vtanh.pop %v2391
        %v2438 = vtanh.pop %v2396
        %v2439 = vtanh.pop %v2399
        %v2440 = vtanh.pop %v2404
        %v2441 = vtanh.pop %v2407
        %v2442 = vadd.f32 %v2410, %v978
        %v2443 = vadd.f32 %v2411, %v979
        %v2444 = vadd.f32 %v2412, %v980
        %v2445 = vadd.f32 %v2413, %v981
        %v2446 = vadd.f32 %v2414, %v982
        %v2447 = vadd.f32 %v2415, %v983
        %v2448 = vadd.f32 %v2416, %v984
        %v2449 = vadd.f32 %v2417, %v985
        %v2450 = vadd.f32 %v2418, %v986
        %v2451 = vadd.f32 %v2419, %v987
        %v2452 = vadd.f32 %v2420, %v988
        %v2453 = vadd.f32 %v2421, %v989
        %v2454 = vadd.f32 %v2422, %v990
        %v2455 = vadd.f32 %v2423, %v991
        %v2456 = vadd.f32 %v2424, %v992
        %v2457 = vadd.f32 %v2425, %v993
        %v2458 = vadd.f32 %v2426, %v994
        %v2459 = vadd.f32 %v2427, %v995
        %v2460 = vadd.f32 %v2428, %v996
        %v2461 = vadd.f32 %v2429, %v997
        %v2462 = vadd.f32 %v2430, %v998
        %v2463 = vadd.f32 %v2431, %v999
        %v2464 = vadd.f32 %v2432, %v1000
        %v2465 = vadd.f32 %v2433, %v1001
        %v2466 = vadd.f32 %v2434, %v1002
        %v2467 = vadd.f32 %v2435, %v1003
        %v2468 = vadd.f32 %v2436, %v1004
        %v2469 = vadd.f32 %v2437, %v1005
        %v2470 = vadd.f32 %v2438, %v1006
        %v2471 = vadd.f32 %v2439, %v1007
        %v2472 = vadd.f32 %v2440, %v1008
        %v2473 = vadd.f32 %v2441, %v1009
        %v2474 = vpack.c.bf16 %v2443, %v2442
        %v2475 = vpack.c.bf16 %v2445, %v2444
        %v2476 = vpack.c.bf16 %v2447, %v2446
        %v2477 = vpack.c.bf16 %v2449, %v2448
        %v2478 = vpack.c.bf16 %v2451, %v2450
        %v2479 = vpack.c.bf16 %v2453, %v2452
        %v2480 = vpack.c.bf16 %v2455, %v2454
        %v2481 = vpack.c.bf16 %v2457, %v2456
        %v2482 = vpack.c.bf16 %v2459, %v2458
        %v2483 = vpack.c.bf16 %v2461, %v2460
        %v2484 = vpack.c.bf16 %v2463, %v2462
        %v2485 = vpack.c.bf16 %v2465, %v2464
        %v2486 = vpack.c.bf16 %v2467, %v2466
        %v2487 = vpack.c.bf16 %v2469, %v2468
        %v2488 = vpack.c.bf16 %v2471, %v2470
        %v2489 = vpack.c.bf16 %v2473, %v2472
        %v2490 = vld [vmem:[#allocation14] sm:$0xf]
        %v2491 = vld [vmem:[#allocation14 + $0x4] sm:$0xf]
        %v2492 = vld [vmem:[#allocation14 + $0x8] sm:$0xf]
        %v2493 = vld [vmem:[#allocation14 + $0xc] sm:$0xf]
        %v2494 = vld [vmem:[#allocation14 + $0x10] sm:$0xf]
        %v2495 = vld [vmem:[#allocation14 + $0x14] sm:$0xf]
        %v2496 = vld [vmem:[#allocation14 + $0x18] sm:$0xf]
        %v2497 = vld [vmem:[#allocation14 + $0x1c] sm:$0xf]
        %v2498 = vld [vmem:[#allocation14 + $0x20] sm:$0xf]
        %v2499 = vld [vmem:[#allocation14 + $0x24] sm:$0xf]
        %v2500 = vld [vmem:[#allocation14 + $0x28] sm:$0xf]
        %v2501 = vld [vmem:[#allocation14 + $0x2c] sm:$0xf]
        %v2502 = vld [vmem:[#allocation14 + $0x30] sm:$0xf]
        %v2503 = vld [vmem:[#allocation14 + $0x34] sm:$0xf]
        %v2504 = vld [vmem:[#allocation14 + $0x38] sm:$0xf]
        %v2505 = vld [vmem:[#allocation14 + $0x3c] sm:$0xf]
        %v2506 = vld [vmem:[%s14] sm:$0x1]
        %v2508 = vlaneseq
        %v2509 = vshrl.u32 %v2508, 7
        %v2510 = vsub.s32 0, %v2509
        %v2511 = vrot.slane %v2506, %v2510
        %v2529 = vunpack.c.l.b16 %v2490
        %v2530 = vunpack.c.l.b16 %v2491
        %v2531 = vunpack.c.l.b16 %v2492
        %v2532 = vunpack.c.l.b16 %v2493
        %v2533 = vunpack.c.l.b16 %v2494
        %v2534 = vunpack.c.l.b16 %v2495
        %v2535 = vunpack.c.l.b16 %v2496
        %v2536 = vunpack.c.l.b16 %v2497
        %v2537 = vunpack.c.l.b16 %v2498
        %v2538 = vunpack.c.l.b16 %v2499
        %v2539 = vunpack.c.l.b16 %v2500
        %v2540 = vunpack.c.l.b16 %v2501
        %v2541 = vunpack.c.l.b16 %v2502
        %v2542 = vunpack.c.l.b16 %v2503
        %v2543 = vunpack.c.l.b16 %v2504
        %v2544 = vunpack.c.l.b16 %v2505
        %v2545 = vpack.c.b16 %v2530, %v2529
        %v2546 = vpack.c.b16 %v2532, %v2531
        %v2547 = vpack.c.b16 %v2534, %v2533
        %v2548 = vpack.c.b16 %v2536, %v2535
        %v2549 = vpack.c.b16 %v2538, %v2537
        %v2550 = vpack.c.b16 %v2540, %v2539
        %v2551 = vpack.c.b16 %v2542, %v2541
        %v2552 = vpack.c.b16 %v2544, %v2543
        %2561 = vmatprep.subr.bf16.mxu0 0
        %2562 = vmatpush1.bf16.msra.mxu0 %v2545
        %2563 = vmatprep.subr.bf16.mxu0 0
        %2564 = vmatpush1.bf16.msra.mxu0 %v2546
        %2565 = vmatprep.subr.bf16.mxu0 0
        %2566 = vmatpush1.bf16.msra.mxu0 %v2547
        %2567 = vmatprep.subr.bf16.mxu0 0
        %2568 = vmatpush1.bf16.msra.mxu0 %v2548
        %2569 = vmatprep.subr.bf16.mxu0 0
        %2570 = vmatpush1.bf16.msra.mxu0 %v2549
        %2571 = vmatprep.subr.bf16.mxu0 0
        %2572 = vmatpush1.bf16.msra.mxu0 %v2550
        %2573 = vmatprep.subr.bf16.mxu0 0
        %2574 = vmatpush1.bf16.msra.mxu0 %v2551
        %2575 = vmatprep.subr.bf16.mxu0 0
        %2576 = vmatpush1.bf16.msra.mxu0 %v2552
        %2577 = vmatprep.subr.bf16.mxu0 0
        %2578 = vmatpush1.bf16.msra.mxu0 0
        %2579 = vmatprep.subr.bf16.mxu0 0
        %2580 = vmatpush1.bf16.msra.mxu0 0
        %2581 = vmatprep.subr.bf16.mxu0 0
        %2582 = vmatpush1.bf16.msra.mxu0 0
        %2583 = vmatprep.subr.bf16.mxu0 0
        %2584 = vmatpush1.bf16.msra.mxu0 0
        %2585 = vmatprep.subr.bf16.mxu0 0
        %2586 = vmatpush1.bf16.msra.mxu0 0
        %2587 = vmatprep.subr.bf16.mxu0 0
        %2588 = vmatpush1.bf16.msra.mxu0 0
        %2589 = vmatprep.subr.bf16.mxu0 0
        %2590 = vmatpush1.bf16.msra.mxu0 0
        %2591 = vmatprep.subr.bf16.mxu0 0
        %2592 = vmatpush1.bf16.msra.mxu0 0
        %2593 = vmatprep.mubr.bf16.mxu0 0
        %2594 = vmatmul.mubr.bf16.gmra.mrb[0].mxu0 %v2474
        %v2595 = vpop.f32.mrb[0].mxu0
        %v2596 = vadd.f32 %v2511, %v2595
        %v2597 = vpop.f32.mrb[0].mxu0
        %v2598 = vpop.f32.mrb[0].mxu0
        %v2599 = vadd.f32 %v2511, %v2598
        %v2600 = vpop.f32.mrb[0].mxu0
        %2601 = vmatprep.mubr.bf16.mxu0 0
        %2602 = vmatmul.mubr.bf16.gmra.mrb[0].mxu0 %v2475
        %v2603 = vpop.f32.mrb[0].mxu0
        %v2604 = vadd.f32 %v2511, %v2603
        %v2605 = vpop.f32.mrb[0].mxu0
        %v2606 = vpop.f32.mrb[0].mxu0
        %v2607 = vadd.f32 %v2511, %v2606
        %v2608 = vpop.f32.mrb[0].mxu0
        %2609 = vmatprep.mubr.bf16.mxu0 0
        %2610 = vmatmul.mubr.bf16.gmra.mrb[0].mxu0 %v2476
        %v2611 = vpop.f32.mrb[0].mxu0
        %v2612 = vadd.f32 %v2511, %v2611
        %v2613 = vpop.f32.mrb[0].mxu0
        %v2614 = vpop.f32.mrb[0].mxu0
        %v2615 = vadd.f32 %v2511, %v2614
        %v2616 = vpop.f32.mrb[0].mxu0
        %2617 = vmatprep.mubr.bf16.mxu0 0
        %2618 = vmatmul.mubr.bf16.gmra.mrb[0].mxu0 %v2477
        %v2619 = vpop.f32.mrb[0].mxu0
        %v2620 = vadd.f32 %v2511, %v2619
        %v2621 = vpop.f32.mrb[0].mxu0
        %v2622 = vpop.f32.mrb[0].mxu0
        %v2623 = vadd.f32 %v2511, %v2622
        %v2624 = vpop.f32.mrb[0].mxu0
        %2625 = vmatprep.mubr.bf16.mxu0 0
        %2626 = vmatmul.mubr.bf16.gmra.mrb[0].mxu0 %v2478
        %v2627 = vpop.f32.mrb[0].mxu0
        %v2628 = vadd.f32 %v2511, %v2627
        %v2629 = vpop.f32.mrb[0].mxu0
        %v2630 = vpop.f32.mrb[0].mxu0
        %v2631 = vadd.f32 %v2511, %v2630
        %v2632 = vpop.f32.mrb[0].mxu0
        %2633 = vmatprep.mubr.bf16.mxu0 0
        %2634 = vmatmul.mubr.bf16.gmra.mrb[0].mxu0 %v2479
        %v2635 = vpop.f32.mrb[0].mxu0
        %v2636 = vadd.f32 %v2511, %v2635
        %v2637 = vpop.f32.mrb[0].mxu0
        %v2638 = vpop.f32.mrb[0].mxu0
        %v2639 = vadd.f32 %v2511, %v2638
        %v2640 = vpop.f32.mrb[0].mxu0
        %2641 = vmatprep.mubr.bf16.mxu0 0
        %2642 = vmatmul.mubr.bf16.gmra.mrb[0].mxu0 %v2480
        %v2643 = vpop.f32.mrb[0].mxu0
        %v2644 = vadd.f32 %v2511, %v2643
        %v2645 = vpop.f32.mrb[0].mxu0
        %v2646 = vpop.f32.mrb[0].mxu0
        %v2647 = vadd.f32 %v2511, %v2646
        %v2648 = vpop.f32.mrb[0].mxu0
        %2649 = vmatprep.mubr.bf16.mxu0 0
        %2650 = vmatmul.mubr.bf16.gmra.mrb[0].mxu0 %v2481
        %v2651 = vpop.f32.mrb[0].mxu0
        %v2652 = vadd.f32 %v2511, %v2651
        %v2653 = vpop.f32.mrb[0].mxu0
        %v2654 = vpop.f32.mrb[0].mxu0
        %v2655 = vadd.f32 %v2511, %v2654
        %v2656 = vpop.f32.mrb[0].mxu0
        %2657 = vmatprep.mubr.bf16.mxu0 0
        %2658 = vmatmul.mubr.bf16.gmra.mrb[0].mxu0 %v2482
        %v2659 = vpop.f32.mrb[0].mxu0
        %v2660 = vadd.f32 %v2511, %v2659
        %v2661 = vpop.f32.mrb[0].mxu0
        %v2662 = vpop.f32.mrb[0].mxu0
        %v2663 = vadd.f32 %v2511, %v2662
        %v2664 = vpop.f32.mrb[0].mxu0
        %2665 = vmatprep.mubr.bf16.mxu0 0
        %2666 = vmatmul.mubr.bf16.gmra.mrb[0].mxu0 %v2483
        %v2667 = vpop.f32.mrb[0].mxu0
        %v2668 = vadd.f32 %v2511, %v2667
        %v2669 = vpop.f32.mrb[0].mxu0
        %v2670 = vpop.f32.mrb[0].mxu0
        %v2671 = vadd.f32 %v2511, %v2670
        %v2672 = vpop.f32.mrb[0].mxu0
        %2673 = vmatprep.mubr.bf16.mxu0 0
        %2674 = vmatmul.mubr.bf16.gmra.mrb[0].mxu0 %v2484
        %v2675 = vpop.f32.mrb[0].mxu0
        %v2676 = vadd.f32 %v2511, %v2675
        %v2677 = vpop.f32.mrb[0].mxu0
        %v2678 = vpop.f32.mrb[0].mxu0
        %v2679 = vadd.f32 %v2511, %v2678
        %v2680 = vpop.f32.mrb[0].mxu0
        %2681 = vmatprep.mubr.bf16.mxu0 0
        %2682 = vmatmul.mubr.bf16.gmra.mrb[0].mxu0 %v2485
        %v2683 = vpop.f32.mrb[0].mxu0
        %v2684 = vadd.f32 %v2511, %v2683
        %v2685 = vpop.f32.mrb[0].mxu0
        %v2686 = vpop.f32.mrb[0].mxu0
        %v2687 = vadd.f32 %v2511, %v2686
        %v2688 = vpop.f32.mrb[0].mxu0
        %2689 = vmatprep.mubr.bf16.mxu0 0
        %2690 = vmatmul.mubr.bf16.gmra.mrb[0].mxu0 %v2486
        %v2691 = vpop.f32.mrb[0].mxu0
        %v2692 = vadd.f32 %v2511, %v2691
        %v2693 = vpop.f32.mrb[0].mxu0
        %v2694 = vpop.f32.mrb[0].mxu0
        %v2695 = vadd.f32 %v2511, %v2694
        %v2696 = vpop.f32.mrb[0].mxu0
        %2697 = vmatprep.mubr.bf16.mxu0 0
        %2698 = vmatmul.mubr.bf16.gmra.mrb[0].mxu0 %v2487
        %v2699 = vpop.f32.mrb[0].mxu0
        %v2700 = vadd.f32 %v2511, %v2699
        %v2701 = vpop.f32.mrb[0].mxu0
        %v2702 = vpop.f32.mrb[0].mxu0
        %v2703 = vadd.f32 %v2511, %v2702
        %v2704 = vpop.f32.mrb[0].mxu0
        %2705 = vmatprep.mubr.bf16.mxu0 0
        %2706 = vmatmul.mubr.bf16.gmra.mrb[0].mxu0 %v2488
        %v2707 = vpop.f32.mrb[0].mxu0
        %v2708 = vadd.f32 %v2511, %v2707
        %v2709 = vpop.f32.mrb[0].mxu0
        %v2710 = vpop.f32.mrb[0].mxu0
        %v2711 = vadd.f32 %v2511, %v2710
        %v2712 = vpop.f32.mrb[0].mxu0
        %2713 = vmatprep.mubr.bf16.mxu0 0
        %2714 = vmatmul.mubr.bf16.gmra.mrb[0].mxu0 %v2489
        %v2715 = vpop.f32.mrb[0].mxu0
        %v2716 = vadd.f32 %v2511, %v2715
        %v2717 = vpop.f32.mrb[0].mxu0
        %v2718 = vpop.f32.mrb[0].mxu0
        %v2719 = vadd.f32 %v2511, %v2718
        %v2720 = vpop.f32.mrb[0].mxu0
        %2721 = vdwg.mxu0
        %2722 = vst [vmem:[%s614] sm:$0xff] %v2596
        %2723 = vst [vmem:[%s614 + $0x8] sm:$0xff] %v2599
        %2724 = vst [vmem:[%s614 + $0x10] sm:$0xff] %v2604
        %2725 = vst [vmem:[%s614 + $0x18] sm:$0xff] %v2607
        %2726 = vst [vmem:[%s614 + $0x20] sm:$0xff] %v2612
        %2727 = vst [vmem:[%s614 + $0x28] sm:$0xff] %v2615
        %2728 = vst [vmem:[%s614 + $0x30] sm:$0xff] %v2620
        %2729 = vst [vmem:[%s614 + $0x38] sm:$0xff] %v2623
        %2730 = vst [vmem:[%s614 + $0x40] sm:$0xff] %v2628
        %2731 = vst [vmem:[%s614 + $0x48] sm:$0xff] %v2631
        %2732 = vst [vmem:[%s614 + $0x50] sm:$0xff] %v2636
        %2733 = vst [vmem:[%s614 + $0x58] sm:$0xff] %v2639
        %2734 = vst [vmem:[%s614 + $0x60] sm:$0xff] %v2644
        %2735 = vst [vmem:[%s614 + $0x68] sm:$0xff] %v2647
        %2736 = vst [vmem:[%s614 + $0x70] sm:$0xff] %v2652
        %2737 = vst [vmem:[%s614 + $0x78] sm:$0xff] %v2655
        %2738 = vst [vmem:[%s614 + $0x80] sm:$0xff] %v2660
        %2739 = vst [vmem:[%s614 + $0x88] sm:$0xff] %v2663
        %2740 = vst [vmem:[%s614 + $0x90] sm:$0xff] %v2668
        %2741 = vst [vmem:[%s614 + $0x98] sm:$0xff] %v2671
        %2742 = vst [vmem:[%s614 + $0xa0] sm:$0xff] %v2676
        %2743 = vst [vmem:[%s614 + $0xa8] sm:$0xff] %v2679
        %2744 = vst [vmem:[%s614 + $0xb0] sm:$0xff] %v2684
        %2745 = vst [vmem:[%s614 + $0xb8] sm:$0xff] %v2687
        %2746 = vst [vmem:[%s614 + $0xc0] sm:$0xff] %v2692
        %2747 = vst [vmem:[%s614 + $0xc8] sm:$0xff] %v2695
        %2748 = vst [vmem:[%s614 + $0xd0] sm:$0xff] %v2700
        %2749 = vst [vmem:[%s614 + $0xd8] sm:$0xff] %v2703
        %2750 = vst [vmem:[%s614 + $0xe0] sm:$0xff] %v2708
        %2751 = vst [vmem:[%s614 + $0xe8] sm:$0xff] %v2711
        %2752 = vst [vmem:[%s614 + $0xf0] sm:$0xff] %v2716
        %2753 = vst [vmem:[%s614 + $0xf8] sm:$0xff] %v2719
        %s2754 = sand.u32 %s364, 1
        %s2755 = scalar_lea.sflag [#allocation4], %s2754
        %s2756 = sand.u32 %s364, 1
        %s2757 = smul.addr %s2756, 256
        %s2758 = scalar_lea.vmem [#allocation16], %s2757
        // Predicated region
        $region113: #{tpu_custom_call.1} parent=79 // pred_check
          %p2759 = pneg %p374
        $region114: #{tpu_custom_call.1} parent=79 // pred_check_branch
          %2761 = sbr.rel (%p2759) target = $region116
        $region115: #{tpu_custom_call.1} parent=79 // pred_region
          %s2762 = smul.u32 32, %s36
          %s2764 = ssub.s32 4096, 4096
          %2765 = vsyncadd %s2755, %s2764
          %s2766 = smul.addr %s2762, 128
          %s2767 = scalar_lea.hbm %s15, %s2766
          %s2768 = sshll.u32 %s2758, 4
          %s2769 = int_to_ptr.vmem [resolvable:$true] %s2768
          %2774 = dma.vmem_to_hbm [thread:$0]  %s2769, 4096, %s2767, %s2755, 128, 128, 8
        $region116: #{tpu_custom_call.1} parent=79 // pred_fallthru
          _
      $region80: #{tpu_custom_call.1} parent=5 // pred_fallthru
        _
      %p2775 = scmp.le.s32.totalorder 2, %s31
      // Predicated region
      $region117: #{tpu_custom_call.1} parent=5 // pred_check
        %p2776 = pneg %p2775
      $region118: #{tpu_custom_call.1} parent=5 // pred_check_branch
        %2778 = sbr.rel (%p2776) target = $region120
      $region119: #{tpu_custom_call.1} parent=5 // pred_region
        %s2779 = ssub.s32 %s31, 2
        // Predicated region
        $region121: #{tpu_custom_call.1} parent=119 // pred_check
          %p2780 = pneg %p380
        $region122: #{tpu_custom_call.1} parent=119 // pred_check_branch
          %2782 = sbr.rel (%p2780) target = $region124
        $region123: #{tpu_custom_call.1} parent=119 // pred_region
          %s2783 = sand.u32 %s365, 1
          %s2784 = scalar_lea.sflag [#allocation4], %s2783
          %s2785 = sand.u32 %s365, 1
          %s2786 = smul.addr %s2785, 256
          %s2787 = scalar_lea.vmem [#allocation16], %s2786
          %2788 = dma.done %s2784, 4096
        $region124: #{tpu_custom_call.1} parent=119 // pred_fallthru
          _
      $region120: #{tpu_custom_call.1} parent=5 // pred_fallthru
        _
    $region6: #{tpu_custom_call.1} parent=1 // loop_footer
      %s35 = sadd.s32 1, %s31
    $region7: #{tpu_custom_call.1} parent=1 // loop_footer_branch
      %30 = sbr.rel target = $region3
    $region8: #{tpu_custom_call.1} parent=1 // loop_exit
      _
    %2789 = vsyncpa [#allocation3], 1
    %s2790 = scalar_lea.sflag [#allocation3], 1
    %2791 = vsyncpa %s2790, 1
    %2792 = vsyncpa [#allocation6], 1
    %2793 = vsyncpa [#allocation9], 1
    %2794 = vsyncpa [#allocation12], 1
    %2795 = vsyncpa [#allocation15], 1
    %2796 = vsyncpa [#allocation4], 1
    %s2797 = scalar_lea.sflag [#allocation4], 1
    %2798 = vsyncpa %s2797, 1

</llo_original>
